<compile_context>
chip_gen: v5e
topology: v5e:2x2
jax: 0.10.0
libtpu: 0.0.40
codegen_flags: <defaults>
</compile_context>

<pallas_src>
import numpy as np
import jax
import jax.numpy as jnp
from jax.experimental import pallas as pl
from jax.experimental.pallas import tpu as pltpu

# ---------------- small, shape-consistent configuration ----------------
B = 16            # batch (scaled up so BT fills the MXU M dim)
T = 8             # video_length (scaled down from 16)
C, H, W = 3, 16, 16
VIT_DIM = 32      # stand-in for the 1000-dim ViT output
CONV_OUT = 16     # stand-in for 64 conv channels
HIDDEN = 32       # stand-in for 512
NUM_CLASSES = 8

BT = B * T        # 128 rows folded into the MXU M dimension
P = T // 2        # pooled temporal length
K_IN = C * H * W  # flattened frame size (768)
LANE = 128        # lane width for per-tap conv blocks and the final store

assert B % 8 == 0 and BT % 8 == 0
assert (B & (B - 1)) == 0 and (T & (T - 1)) == 0   # cheap bit-op index math
B_SHIFT = B.bit_length() - 1


# ---------------- fused Pallas kernel ----------------
def _fused_forward_kernel(frames_ref, vit_w_ref, conv_w_ref, fc1_w_ref,
                          fc2_w_ref, bias_ref, o_ref):
    f32 = jnp.float32

    # ---- per-frame "ViT" projection: bf16 MXU, f32 accumulation ----
    fr_bf = frames_ref[...].astype(jnp.bfloat16)                    # (BT, K_IN)
    feats = jnp.dot(fr_bf, vit_w_ref[...], preferred_element_type=f32)
    feats = feats + bias_ref[0:1, 0:VIT_DIM]                        # (BT, VIT_DIM)

    # ---- effective 3-tap temporal Conv3d: one stacked matmul (taps in
    #      128-lane blocks so the slices below stay lane-aligned) ----
    y_all = jnp.dot(feats, conv_w_ref[...], preferred_element_type=f32)   # (BT, 3*LANE)
    y0 = y_all[:, 0:LANE]              # tap kd=0 (needs input time t-1)
    y1 = y_all[:, LANE:2 * LANE]       # tap kd=1 (input time t)
    y2 = y_all[:, 2 * LANE:3 * LANE]   # tap kd=2 (needs input time t+1)

    # Temporal shifts on the XLU (roll) + VPU boundary masks -- off the MXU
    # chain.  Circular wrap rows are exactly the masked rows, so it is exact.
    t_id = jax.lax.broadcasted_iota(jnp.int32, (BT, LANE), 0) & (T - 1)
    prev = jnp.where(t_id != 0, pltpu.roll(y0, shift=1, axis=0), 0.0)
    nxt = jnp.where(t_id != T - 1, pltpu.roll(y2, shift=BT - 1, axis=0), 0.0)
    conv = jnp.maximum(y1 + prev + nxt + bias_ref[1:2, :], 0.0)     # ReLU, (BT, LANE)

    # ---- temporal MaxPool(2): max with the next time row; even-t rows valid ----
    maxed = jnp.maximum(conv, pltpu.roll(conv, shift=BT - 1, axis=0))

    # Gather the even-t rows into (d, b)-major order with an in-kernel 0/1
    # matrix built from iota (no HBM bytes, one small K=128 matmul).
    q = jax.lax.broadcasted_iota(jnp.int32, (P * B, BT), 0)
    cidx = jax.lax.broadcasted_iota(jnp.int32, (P * B, BT), 1)
    b_idx = q & (B - 1)
    d_idx = jnp.right_shift(q, B_SHIFT)
    sel = (cidx == b_idx * T + 2 * d_idx).astype(f32)
    pooled = jnp.dot(sel, maxed, preferred_element_type=f32)        # (P*B, LANE)

    # ---- fc1 + ReLU: lane-aligned concat of the P pooled blocks -> ONE dot ----
    h1_in = jnp.concatenate([pooled[d * B:(d + 1) * B, :] for d in range(P)],
                            axis=1)                                  # (B, P*LANE)
    h1 = jnp.dot(h1_in, fc1_w_ref[...], preferred_element_type=f32)
    h1 = jnp.maximum(h1 + bias_ref[2:3, 0:HIDDEN], 0.0)             # (B, HIDDEN)

    # ---- fc2 (128-lane padded N => unmasked lane-dense store) ----
    out = jnp.dot(h1, fc2_w_ref[...], preferred_element_type=f32) + bias_ref[3:4, :]
    o_ref[...] = out.astype(o_ref.dtype)


def forward(x, kp):
    b, t, c, h, w = x.shape
    frames = x.reshape(b * t, c * h * w)          # contiguous, free reshape
    out_p = pl.pallas_call(
        _fused_forward_kernel,
        out_shape=jax.ShapeDtypeStruct((B, LANE), jnp.float32),
        grid_spec=pltpu.PrefetchScalarGridSpec(
            num_scalar_prefetch=0,
            grid=(1,),
            in_specs=[
                pl.BlockSpec((BT, K_IN), lambda i: (0, 0)),          # frames (f32)
                pl.BlockSpec((K_IN, VIT_DIM), lambda i: (0, 0)),     # vit_w (bf16, compact)
                pl.BlockSpec((VIT_DIM, 3 * LANE), lambda i: (0, 0)), # conv taps stacked (bf16)
                pl.BlockSpec((P * LANE, HIDDEN), lambda i: (0, 0)),  # fc1_w (bf16, compact N)
                pl.BlockSpec((HIDDEN, LANE), lambda i: (0, 0)),      # fc2_w (bf16, padded N)
                pl.BlockSpec((8, LANE), lambda i: (0, 0)),           # packed biases (f32)
            ],
            out_specs=pl.BlockSpec((B, LANE), lambda i: (0, 0)),
        ),
        compiler_params=pltpu.CompilerParams(
            dimension_semantics=("arbitrary",)),                     # <2 MiB VMEM: fine on v7x too
    )(frames, kp["vit_w"], kp["conv_w"], kp["fc1_w"], kp["fc2_w"], kp["bias"])
    return out_p[:, :NUM_CLASSES]


# ---------------- raw (torch-layout) params + one-time kernel packing ----------------
def make_params(key):
    ks = jax.random.split(key, 8)
    return {
        "vit_w": 0.02 * jax.random.normal(ks[0], (K_IN, VIT_DIM), jnp.float32),
        "vit_b": 0.02 * jax.random.normal(ks[1], (VIT_DIM,), jnp.float32),
        "conv_w": 0.05 * jax.random.normal(ks[2], (CONV_OUT, VIT_DIM, 3, 3, 3), jnp.float32),
        "conv_b": 0.05 * jax.random.normal(ks[3], (CONV_OUT,), jnp.float32),
        # Linear weights stored as (in, out) == torch_weight.T (synthetic init).
        # fc1 input ordering follows the PyTorch flatten: index = c * (T//2) + d.
        "fc1_w": 0.05 * jax.random.normal(ks[4], (P * CONV_OUT, HIDDEN), jnp.float32),
        "fc1_b": 0.05 * jax.random.normal(ks[5], (HIDDEN,), jnp.float32),
        "fc2_w": 0.05 * jax.random.normal(ks[6], (HIDDEN, NUM_CLASSES), jnp.float32),
        "fc2_b": 0.05 * jax.random.normal(ks[7], (NUM_CLASSES,), jnp.float32),
    }


def pack_params(p):
    """One-time host-side packing: compact widths, bf16 weights (f32 accumulate
    in-kernel), conv taps stacked in 128-lane blocks, the channel-major flatten
    folded into fc1's row order, all biases in one (8,128) f32 slab."""
    vit_w = np.asarray(p["vit_w"], np.float32)                       # (K_IN, VIT_DIM)

    conv_w = np.asarray(p["conv_w"])                                 # (Cout, Cin, 3, 3, 3)
    conv_w_p = np.zeros((VIT_DIM, 3 * LANE), np.float32)
    for kd in range(3):
        # only the (kh=1, kw=1) taps touch real data on a (D=T, H=1, W=1) volume
        conv_w_p[:, kd * LANE:kd * LANE + CONV_OUT] = conv_w[:, :, kd, 1, 1].T

    fc1_w = np.asarray(p["fc1_w"])                                   # torch flatten order c*P + d
    fc1_w_p = np.zeros((P * LANE, HIDDEN), np.float32)
    for d in range(P):
        for c_ in range(CONV_OUT):
            fc1_w_p[d * LANE + c_, :] = fc1_w[c_ * P + d, :]

    fc2_w_p = np.zeros((HIDDEN, LANE), np.float32)
    fc2_w_p[:, :NUM_CLASSES] = np.asarray(p["fc2_w"])

    bias = np.zeros((8, LANE), np.float32)
    bias[0, :VIT_DIM] = np.asarray(p["vit_b"])
    bias[1, :CONV_OUT] = np.asarray(p["conv_b"])
    bias[2, :HIDDEN] = np.asarray(p["fc1_b"])
    bias[3, :NUM_CLASSES] = np.asarray(p["fc2_b"])

    return {
        "vit_w": jnp.asarray(vit_w, jnp.bfloat16),
        "conv_w": jnp.asarray(conv_w_p, jnp.bfloat16),
        "fc1_w": jnp.asarray(fc1_w_p, jnp.bfloat16),
        "fc2_w": jnp.asarray(fc2_w_p, jnp.bfloat16),
        "bias": jnp.asarray(bias, jnp.float32),
    }


# ---------------- pure-JAX f32 reference for correctness ----------------
def reference_forward(x, params):
    b, t, c, h, w = x.shape
    frames = x.reshape(b * t, c * h * w)
    feats = (frames @ params["vit_w"] + params["vit_b"]).reshape(b, t, VIT_DIM)
    xp = jnp.pad(feats, ((0, 0), (1, 1), (0, 0)))
    conv_w = params["conv_w"]  # (Cout, Cin, 3, 3, 3) PyTorch layout
    outs = []
    for d in range(t):
        acc = params["conv_b"]
        for kd in range(3):
            acc = acc + xp[:, d + kd, :] @ conv_w[:, :, kd, 1, 1].T
        outs.append(acc)
    conv = jnp.maximum(jnp.stack(outs, axis=1), 0.0)                 # (b, t, Cout)
    pooled = jnp.maximum(conv[:, 0::2], conv[:, 1::2])               # (b, t//2, Cout)
    flat = jnp.transpose(pooled, (0, 2, 1)).reshape(b, -1)           # channel-major flatten
    h1 = jnp.maximum(flat @ params["fc1_w"] + params["fc1_b"], 0.0)
    return h1 @ params["fc2_w"] + params["fc2_b"]


if __name__ == "__main__":
    key = jax.random.PRNGKey(0)
    kx, kp = jax.random.split(key)
    x = jax.random.normal(kx, (B, T, C, H, W), jnp.float32)
    raw_params = make_params(kp)
    kernel_params = pack_params(raw_params)

    out = jax.jit(forward)(x, kernel_params)
    out = jax.block_until_ready(out)
    assert out.shape == (B, NUM_CLASSES), out.shape

    ref = reference_forward(x, raw_params)
    assert bool(jnp.all(jnp.isfinite(out)))
    # bf16 weights + bf16 frame cast (f32 accumulation) -> slightly looser tol.
    assert jnp.allclose(out, ref, rtol=2e-2, atol=2e-2), float(jnp.max(jnp.abs(out - ref)))

    print("KERNEL_OK")
</pallas_src>

<mosaic_0001>
module attributes {stable_mosaic.version = 11 : i64} {
  func.func @_fused_forward_kernel(%arg0: i32, %arg1: memref<128x768xf32, #tpu.memory_space<vmem>>, %arg2: memref<768x32xbf16, #tpu.memory_space<vmem>>, %arg3: memref<32x384xbf16, #tpu.memory_space<vmem>>, %arg4: memref<512x32xbf16, #tpu.memory_space<vmem>>, %arg5: memref<32x128xbf16, #tpu.memory_space<vmem>>, %arg6: memref<8x128xf32, #tpu.memory_space<vmem>>, %arg7: memref<16x128xf32, #tpu.memory_space<vmem>>) attributes {dimension_semantics = [#tpu.dimension_semantics<arbitrary>], iteration_bounds = array<i64: 1>, scalar_prefetch = 0 : i64, scratch_operands = 0 : i64, tpu.core_type = #tpu.core_type<tc>, window_params = [{pipeline_mode = #tpu.pipeline_mode<synchronous>, transform_indices = @transform_0, window_bounds = array<i64: 128, 768>}, {pipeline_mode = #tpu.pipeline_mode<synchronous>, transform_indices = @transform_1, window_bounds = array<i64: 768, 32>}, {pipeline_mode = #tpu.pipeline_mode<synchronous>, transform_indices = @transform_2, window_bounds = array<i64: 32, 384>}, {pipeline_mode = #tpu.pipeline_mode<synchronous>, transform_indices = @transform_3, window_bounds = array<i64: 512, 32>}, {pipeline_mode = #tpu.pipeline_mode<synchronous>, transform_indices = @transform_4, window_bounds = array<i64: 32, 128>}, {pipeline_mode = #tpu.pipeline_mode<synchronous>, transform_indices = @transform_5, window_bounds = array<i64: 8, 128>}, {pipeline_mode = #tpu.pipeline_mode<synchronous>, transform_indices = @transform_6, window_bounds = array<i64: 16, 128>}]} {
    %c0 = arith.constant 0 : index
    %c0_0 = arith.constant 0 : index
    %0 = vector.load %arg1[%c0, %c0_0] : memref<128x768xf32, #tpu.memory_space<vmem>>, vector<128x768xf32>
    %1 = arith.truncf %0 : vector<128x768xf32> to vector<128x768xbf16>
    %c0_1 = arith.constant 0 : index
    %c0_2 = arith.constant 0 : index
    %2 = vector.load %arg2[%c0_1, %c0_2] : memref<768x32xbf16, #tpu.memory_space<vmem>>, vector<768x32xbf16>
    %cst = arith.constant dense<0.000000e+00> : vector<128x32xf32>
    %3 = tpu.matmul %1, %2, %cst {dimension_numbers = #tpu.dot_dimension_numbers<[1], [0], [0], [1], [0, 0, 1, 1], [], []>} : vector<128x768xbf16>, vector<768x32xbf16>, vector<128x32xf32> -> vector<128x32xf32>
    %c0_3 = arith.constant 0 : index
    %c0_4 = arith.constant 0 : index
    %4 = vector.load %arg6[%c0_3, %c0_4] : memref<8x128xf32, #tpu.memory_space<vmem>>, vector<1x32xf32>
    %5 = vector.broadcast %4 : vector<1x32xf32> to vector<128x32xf32>
    %6 = arith.addf %3, %5 : vector<128x32xf32>
    %c0_5 = arith.constant 0 : index
    %c0_6 = arith.constant 0 : index
    %7 = vector.load %arg3[%c0_5, %c0_6] : memref<32x384xbf16, #tpu.memory_space<vmem>>, vector<32x384xbf16>
    %cst_7 = arith.constant dense<0.000000e+00> : vector<128x384xf32>
    %8 = tpu.matmul %6, %7, %cst_7 {dimension_numbers = #tpu.dot_dimension_numbers<[1], [0], [0], [1], [0, 0, 1, 1], [], []>} : vector<128x32xf32>, vector<32x384xbf16>, vector<128x384xf32> -> vector<128x384xf32>
    %9 = vector.extract_strided_slice %8 {offsets = [0, 0], sizes = [128, 128], strides = [1, 1]} : vector<128x384xf32> to vector<128x128xf32>
    %10 = vector.extract_strided_slice %8 {offsets = [0, 128], sizes = [128, 128], strides = [1, 1]} : vector<128x384xf32> to vector<128x128xf32>
    %11 = vector.extract_strided_slice %8 {offsets = [0, 256], sizes = [128, 128], strides = [1, 1]} : vector<128x384xf32> to vector<128x128xf32>
    %12 = tpu.iota {dimensions = array<i32: 0>} : vector<128x128xi32>
    %c7_i32 = arith.constant 7 : i32
    %13 = vector.broadcast %c7_i32 : i32 to vector<128x128xi32>
    %14 = arith.andi %12, %13 : vector<128x128xi32>
    %c0_i32 = arith.constant 0 : i32
    %15 = vector.broadcast %c0_i32 : i32 to vector<128x128xi32>
    %16 = arith.cmpi ne, %14, %15 : vector<128x128xi32>
    %c1_i32 = arith.constant 1 : i32
    %17 = tpu.dynamic_rotate %9 by %c1_i32 dim 0 : vector<128x128xf32>, i32 -> vector<128x128xf32>
    %cst_8 = arith.constant 0.000000e+00 : f32
    %18 = vector.broadcast %cst_8 : f32 to vector<128x128xf32>
    %19 = arith.select %16, %17, %18 : vector<128x128xi1>, vector<128x128xf32>
    %c7_i32_9 = arith.constant 7 : i32
    %20 = vector.broadcast %c7_i32_9 : i32 to vector<128x128xi32>
    %21 = arith.cmpi ne, %14, %20 : vector<128x128xi32>
    %c127_i32 = arith.constant 127 : i32
    %22 = tpu.dynamic_rotate %11 by %c127_i32 dim 0 : vector<128x128xf32>, i32 -> vector<128x128xf32>
    %cst_10 = arith.constant 0.000000e+00 : f32
    %23 = vector.broadcast %cst_10 : f32 to vector<128x128xf32>
    %24 = arith.select %21, %22, %23 : vector<128x128xi1>, vector<128x128xf32>
    %25 = arith.addf %10, %19 : vector<128x128xf32>
    %26 = arith.addf %25, %24 : vector<128x128xf32>
    %c1 = arith.constant 1 : index
    %c0_11 = arith.constant 0 : index
    %27 = vector.load %arg6[%c1, %c0_11] : memref<8x128xf32, #tpu.memory_space<vmem>>, vector<1x128xf32>
    %28 = vector.broadcast %27 : vector<1x128xf32> to vector<128x128xf32>
    %29 = arith.addf %26, %28 : vector<128x128xf32>
    %cst_12 = arith.constant 0.000000e+00 : f32
    %30 = vector.broadcast %cst_12 : f32 to vector<128x128xf32>
    %31 = arith.maximumf %29, %30 : vector<128x128xf32>
    %c127_i32_13 = arith.constant 127 : i32
    %32 = tpu.dynamic_rotate %31 by %c127_i32_13 dim 0 : vector<128x128xf32>, i32 -> vector<128x128xf32>
    %33 = arith.maximumf %31, %32 : vector<128x128xf32>
    %34 = tpu.iota {dimensions = array<i32: 0>} : vector<64x128xi32>
    %35 = tpu.iota {dimensions = array<i32: 1>} : vector<64x128xi32>
    %c15_i32 = arith.constant 15 : i32
    %36 = vector.broadcast %c15_i32 : i32 to vector<64x128xi32>
    %37 = arith.andi %34, %36 : vector<64x128xi32>
    %c4_i32 = arith.constant 4 : i32
    %38 = vector.broadcast %c4_i32 : i32 to vector<64x128xi32>
    %39 = arith.shrsi %34, %38 : vector<64x128xi32>
    %c8_i32 = arith.constant 8 : i32
    %40 = vector.broadcast %c8_i32 : i32 to vector<64x128xi32>
    %41 = arith.muli %37, %40 : vector<64x128xi32>
    %c2_i32 = arith.constant 2 : i32
    %42 = vector.broadcast %c2_i32 : i32 to vector<64x128xi32>
    %43 = arith.muli %42, %39 : vector<64x128xi32>
    %44 = arith.addi %41, %43 : vector<64x128xi32>
    %45 = arith.cmpi eq, %35, %44 : vector<64x128xi32>
    %46 = arith.extui %45 : vector<64x128xi1> to vector<64x128xi32>
    %47 = arith.sitofp %46 : vector<64x128xi32> to vector<64x128xf32>
    %cst_14 = arith.constant dense<0.000000e+00> : vector<64x128xf32>
    %48 = tpu.matmul %47, %33, %cst_14 {dimension_numbers = #tpu.dot_dimension_numbers<[1], [0], [0], [1], [0, 0, 1, 1], [], []>} : vector<64x128xf32>, vector<128x128xf32>, vector<64x128xf32> -> vector<64x128xf32>
    %49 = vector.extract_strided_slice %48 {offsets = [0, 0], sizes = [16, 128], strides = [1, 1]} : vector<64x128xf32> to vector<16x128xf32>
    %50 = vector.extract_strided_slice %48 {offsets = [16, 0], sizes = [16, 128], strides = [1, 1]} : vector<64x128xf32> to vector<16x128xf32>
    %51 = vector.extract_strided_slice %48 {offsets = [32, 0], sizes = [16, 128], strides = [1, 1]} : vector<64x128xf32> to vector<16x128xf32>
    %52 = vector.extract_strided_slice %48 {offsets = [48, 0], sizes = [16, 128], strides = [1, 1]} : vector<64x128xf32> to vector<16x128xf32>
    %53 = tpu.concatenate %49, %50, %51, %52 in 1 : vector<16x128xf32>, vector<16x128xf32>, vector<16x128xf32>, vector<16x128xf32> -> vector<16x512xf32>
    %c0_15 = arith.constant 0 : index
    %c0_16 = arith.constant 0 : index
    %54 = vector.load %arg4[%c0_15, %c0_16] : memref<512x32xbf16, #tpu.memory_space<vmem>>, vector<512x32xbf16>
    %cst_17 = arith.constant dense<0.000000e+00> : vector<16x32xf32>
    %55 = tpu.matmul %53, %54, %cst_17 {dimension_numbers = #tpu.dot_dimension_numbers<[1], [0], [0], [1], [0, 0, 1, 1], [], []>} : vector<16x512xf32>, vector<512x32xbf16>, vector<16x32xf32> -> vector<16x32xf32>
    %c2 = arith.constant 2 : index
    %c0_18 = arith.constant 0 : index
    %56 = vector.load %arg6[%c2, %c0_18] : memref<8x128xf32, #tpu.memory_space<vmem>>, vector<1x32xf32>
    %57 = vector.broadcast %56 : vector<1x32xf32> to vector<16x32xf32>
    %58 = arith.addf %55, %57 : vector<16x32xf32>
    %cst_19 = arith.constant 0.000000e+00 : f32
    %59 = vector.broadcast %cst_19 : f32 to vector<16x32xf32>
    %60 = arith.maximumf %58, %59 : vector<16x32xf32>
    %c0_20 = arith.constant 0 : index
    %c0_21 = arith.constant 0 : index
    %61 = vector.load %arg5[%c0_20, %c0_21] : memref<32x128xbf16, #tpu.memory_space<vmem>>, vector<32x128xbf16>
    %cst_22 = arith.constant dense<0.000000e+00> : vector<16x128xf32>
    %62 = tpu.matmul %60, %61, %cst_22 {dimension_numbers = #tpu.dot_dimension_numbers<[1], [0], [0], [1], [0, 0, 1, 1], [], []>} : vector<16x32xf32>, vector<32x128xbf16>, vector<16x128xf32> -> vector<16x128xf32>
    %c3 = arith.constant 3 : index
    %c0_23 = arith.constant 0 : index
    %63 = vector.load %arg6[%c3, %c0_23] : memref<8x128xf32, #tpu.memory_space<vmem>>, vector<1x128xf32>
    %64 = vector.broadcast %63 : vector<1x128xf32> to vector<16x128xf32>
    %65 = arith.addf %62, %64 : vector<16x128xf32>
    %c0_24 = arith.constant 0 : index
    %c0_25 = arith.constant 0 : index
    %66 = vector.load %arg7[%c0_24, %c0_25] : memref<16x128xf32, #tpu.memory_space<vmem>>, vector<16x128xf32>
    tpu.vector_store %arg7[%c0_24, %c0_25], %65 {strides = array<i32>} : memref<16x128xf32, #tpu.memory_space<vmem>>, vector<16x128xf32>,
    return
  }
  func.func @transform_0(%arg0: i32) -> (i32, i32) {
    %c0_i32 = arith.constant 0 : i32
    %c0_i32_0 = arith.constant 0 : i32
    %c0_i32_1 = arith.constant 0 : i32
    return %c0_i32, %c0_i32_0 : i32, i32
  }
  func.func @transform_1(%arg0: i32) -> (i32, i32) {
    %c0_i32 = arith.constant 0 : i32
    %c0_i32_0 = arith.constant 0 : i32
    %c0_i32_1 = arith.constant 0 : i32
    return %c0_i32, %c0_i32_0 : i32, i32
  }
  func.func @transform_2(%arg0: i32) -> (i32, i32) {
    %c0_i32 = arith.constant 0 : i32
    %c0_i32_0 = arith.constant 0 : i32
    %c0_i32_1 = arith.constant 0 : i32
    return %c0_i32, %c0_i32_0 : i32, i32
  }
  func.func @transform_3(%arg0: i32) -> (i32, i32) {
    %c0_i32 = arith.constant 0 : i32
    %c0_i32_0 = arith.constant 0 : i32
    %c0_i32_1 = arith.constant 0 : i32
    return %c0_i32, %c0_i32_0 : i32, i32
  }
  func.func @transform_4(%arg0: i32) -> (i32, i32) {
    %c0_i32 = arith.constant 0 : i32
    %c0_i32_0 = arith.constant 0 : i32
    %c0_i32_1 = arith.constant 0 : i32
    return %c0_i32, %c0_i32_0 : i32, i32
  }
  func.func @transform_5(%arg0: i32) -> (i32, i32) {
    %c0_i32 = arith.constant 0 : i32
    %c0_i32_0 = arith.constant 0 : i32
    %c0_i32_1 = arith.constant 0 : i32
    return %c0_i32, %c0_i32_0 : i32, i32
  }
  func.func @transform_6(%arg0: i32) -> (i32, i32) {
    %c0_i32 = arith.constant 0 : i32
    %c0_i32_0 = arith.constant 0 : i32
    %c0_i32_1 = arith.constant 0 : i32
    return %c0_i32, %c0_i32_0 : i32, i32
  }
}

</mosaic_0001>

<llo_original>
// kernel: forward.1
$region0: #{forward.1}
  #allocation0 [shape = 'u32[]', space=smem, size = 0x4, offset = 0x4, fixed_abs, tag = 'smem constant byte address 0x4 - core index']
  #allocation1 [shape = 'u32[72,128]{1,0:T(1,128)}', space=vmem, size = 0x9000, scoped, tag = 'internal scratch']
  %s0 = inlined_call_operand.vmem [shape: f32[128,768], index: 0, kind: input, shape index: {}]
  %s1 = inlined_call_operand.vmem [shape: bf16[768,32], index: 1, kind: input, shape index: {}]
  %s2 = inlined_call_operand.vmem [shape: bf16[32,384], index: 2, kind: input, shape index: {}]
  %s3 = inlined_call_operand.vmem [shape: bf16[512,32], index: 3, kind: input, shape index: {}]
  %s4 = inlined_call_operand.vmem [shape: bf16[32,128], index: 4, kind: input, shape index: {}]
  %s5 = inlined_call_operand.vmem [shape: f32[8,128], index: 5, kind: input, shape index: {}]
  %s6 = inlined_call_operand.vmem [shape: f32[16,128], index: 6, kind: output, shape index: {}]
  %s7 = sld [smem:[#allocation0]]
  $region34: #{forward.1} parent=0
    _
  %s9 = ssub.s32 1, %s7
  %s10 = scalar_select 0, %s9, %s7
  // Predicated region
  $region2: #{forward.1} parent=0 // pred_check
    _
  $region3: #{forward.1} parent=0 // pred_check_branch
    %12 = sbr.rel (0) target = $region5
  $region4: #{forward.1} parent=0 // pred_region
    _
  $region5: #{forward.1} parent=0 // pred_fallthru
    _
  // Predicated region
  $region6: #{forward.1} parent=0 // pred_check
    _
  $region7: #{forward.1} parent=0 // pred_check_branch
    %14 = sbr.rel (0) target = $region9
  $region8: #{forward.1} parent=0 // pred_region
    _
  $region9: #{forward.1} parent=0 // pred_fallthru
    _
  // Predicated region
  $region10: #{forward.1} parent=0 // pred_check
    _
  $region11: #{forward.1} parent=0 // pred_check_branch
    %16 = sbr.rel (0) target = $region13
  $region12: #{forward.1} parent=0 // pred_region
    _
  $region13: #{forward.1} parent=0 // pred_fallthru
    _
  // Predicated region
  $region14: #{forward.1} parent=0 // pred_check
    _
  $region15: #{forward.1} parent=0 // pred_check_branch
    %18 = sbr.rel (0) target = $region17
  $region16: #{forward.1} parent=0 // pred_region
    _
  $region17: #{forward.1} parent=0 // pred_fallthru
    _
  // Predicated region
  $region18: #{forward.1} parent=0 // pred_check
    _
  $region19: #{forward.1} parent=0 // pred_check_branch
    %20 = sbr.rel (0) target = $region21
  $region20: #{forward.1} parent=0 // pred_region
    _
  $region21: #{forward.1} parent=0 // pred_fallthru
    _
  // Predicated region
  $region22: #{forward.1} parent=0 // pred_check
    _
  $region23: #{forward.1} parent=0 // pred_check_branch
    %22 = sbr.rel (0) target = $region25
  $region24: #{forward.1} parent=0 // pred_region
    _
  $region25: #{forward.1} parent=0 // pred_fallthru
    _
  %v24 = vld [vmem:[%s0] sm:$0xff]
  %v25 = vld [vmem:[%s0 + $0x8] sm:$0xff]
  %v26 = vld [vmem:[%s0 + $0x10] sm:$0xff]
  %v27 = vld [vmem:[%s0 + $0x18] sm:$0xff]
  %v28 = vld [vmem:[%s0 + $0x20] sm:$0xff]
  %v29 = vld [vmem:[%s0 + $0x28] sm:$0xff]
  %v30 = vld [vmem:[%s0 + $0x30] sm:$0xff]
  %v31 = vld [vmem:[%s0 + $0x38] sm:$0xff]
  %v32 = vld [vmem:[%s0 + $0x40] sm:$0xff]
  %v33 = vld [vmem:[%s0 + $0x48] sm:$0xff]
  %v34 = vld [vmem:[%s0 + $0x50] sm:$0xff]
  %v35 = vld [vmem:[%s0 + $0x58] sm:$0xff]
  %v36 = vld [vmem:[%s0 + $0x60] sm:$0xff]
  %v37 = vld [vmem:[%s0 + $0x68] sm:$0xff]
  %v38 = vld [vmem:[%s0 + $0x70] sm:$0xff]
  %v39 = vld [vmem:[%s0 + $0x78] sm:$0xff]
  %v40 = vld [vmem:[%s0 + $0x80] sm:$0xff]
  %v41 = vld [vmem:[%s0 + $0x88] sm:$0xff]
  %v42 = vld [vmem:[%s0 + $0x90] sm:$0xff]
  %v43 = vld [vmem:[%s0 + $0x98] sm:$0xff]
  %v44 = vld [vmem:[%s0 + $0xa0] sm:$0xff]
  %v45 = vld [vmem:[%s0 + $0xa8] sm:$0xff]
  %v46 = vld [vmem:[%s0 + $0xb0] sm:$0xff]
  %v47 = vld [vmem:[%s0 + $0xb8] sm:$0xff]
  %v48 = vld [vmem:[%s0 + $0xc0] sm:$0xff]
  %v49 = vld [vmem:[%s0 + $0xc8] sm:$0xff]
  %v50 = vld [vmem:[%s0 + $0xd0] sm:$0xff]
  %v51 = vld [vmem:[%s0 + $0xd8] sm:$0xff]
  %v52 = vld [vmem:[%s0 + $0xe0] sm:$0xff]
  %v53 = vld [vmem:[%s0 + $0xe8] sm:$0xff]
  %v54 = vld [vmem:[%s0 + $0xf0] sm:$0xff]
  %v55 = vld [vmem:[%s0 + $0xf8] sm:$0xff]
  %v56 = vld [vmem:[%s0 + $0x100] sm:$0xff]
  %v57 = vld [vmem:[%s0 + $0x108] sm:$0xff]
  %v58 = vld [vmem:[%s0 + $0x110] sm:$0xff]
  %v59 = vld [vmem:[%s0 + $0x118] sm:$0xff]
  %v60 = vld [vmem:[%s0 + $0x120] sm:$0xff]
  %v61 = vld [vmem:[%s0 + $0x128] sm:$0xff]
  %v62 = vld [vmem:[%s0 + $0x130] sm:$0xff]
  %v63 = vld [vmem:[%s0 + $0x138] sm:$0xff]
  %v64 = vld [vmem:[%s0 + $0x140] sm:$0xff]
  %v65 = vld [vmem:[%s0 + $0x148] sm:$0xff]
  %v66 = vld [vmem:[%s0 + $0x150] sm:$0xff]
  %v67 = vld [vmem:[%s0 + $0x158] sm:$0xff]
  %v68 = vld [vmem:[%s0 + $0x160] sm:$0xff]
  %v69 = vld [vmem:[%s0 + $0x168] sm:$0xff]
  %v70 = vld [vmem:[%s0 + $0x170] sm:$0xff]
  %v71 = vld [vmem:[%s0 + $0x178] sm:$0xff]
  %v72 = vld [vmem:[%s0 + $0x180] sm:$0xff]
  %v73 = vld [vmem:[%s0 + $0x188] sm:$0xff]
  %v74 = vld [vmem:[%s0 + $0x190] sm:$0xff]
  %v75 = vld [vmem:[%s0 + $0x198] sm:$0xff]
  %v76 = vld [vmem:[%s0 + $0x1a0] sm:$0xff]
  %v77 = vld [vmem:[%s0 + $0x1a8] sm:$0xff]
  %v78 = vld [vmem:[%s0 + $0x1b0] sm:$0xff]
  %v79 = vld [vmem:[%s0 + $0x1b8] sm:$0xff]
  %v80 = vld [vmem:[%s0 + $0x1c0] sm:$0xff]
  %v81 = vld [vmem:[%s0 + $0x1c8] sm:$0xff]
  %v82 = vld [vmem:[%s0 + $0x1d0] sm:$0xff]
  %v83 = vld [vmem:[%s0 + $0x1d8] sm:$0xff]
  %v84 = vld [vmem:[%s0 + $0x1e0] sm:$0xff]
  %v85 = vld [vmem:[%s0 + $0x1e8] sm:$0xff]
  %v86 = vld [vmem:[%s0 + $0x1f0] sm:$0xff]
  %v87 = vld [vmem:[%s0 + $0x1f8] sm:$0xff]
  %v88 = vld [vmem:[%s0 + $0x200] sm:$0xff]
  %v89 = vld [vmem:[%s0 + $0x208] sm:$0xff]
  %v90 = vld [vmem:[%s0 + $0x210] sm:$0xff]
  %v91 = vld [vmem:[%s0 + $0x218] sm:$0xff]
  %v92 = vld [vmem:[%s0 + $0x220] sm:$0xff]
  %v93 = vld [vmem:[%s0 + $0x228] sm:$0xff]
  %v94 = vld [vmem:[%s0 + $0x230] sm:$0xff]
  %v95 = vld [vmem:[%s0 + $0x238] sm:$0xff]
  %v96 = vld [vmem:[%s0 + $0x240] sm:$0xff]
  %v97 = vld [vmem:[%s0 + $0x248] sm:$0xff]
  %v98 = vld [vmem:[%s0 + $0x250] sm:$0xff]
  %v99 = vld [vmem:[%s0 + $0x258] sm:$0xff]
  %v100 = vld [vmem:[%s0 + $0x260] sm:$0xff]
  %v101 = vld [vmem:[%s0 + $0x268] sm:$0xff]
  %v102 = vld [vmem:[%s0 + $0x270] sm:$0xff]
  %v103 = vld [vmem:[%s0 + $0x278] sm:$0xff]
  %v104 = vld [vmem:[%s0 + $0x280] sm:$0xff]
  %v105 = vld [vmem:[%s0 + $0x288] sm:$0xff]
  %v106 = vld [vmem:[%s0 + $0x290] sm:$0xff]
  %v107 = vld [vmem:[%s0 + $0x298] sm:$0xff]
  %v108 = vld [vmem:[%s0 + $0x2a0] sm:$0xff]
  %v109 = vld [vmem:[%s0 + $0x2a8] sm:$0xff]
  %v110 = vld [vmem:[%s0 + $0x2b0] sm:$0xff]
  %v111 = vld [vmem:[%s0 + $0x2b8] sm:$0xff]
  %v112 = vld [vmem:[%s0 + $0x2c0] sm:$0xff]
  %v113 = vld [vmem:[%s0 + $0x2c8] sm:$0xff]
  %v114 = vld [vmem:[%s0 + $0x2d0] sm:$0xff]
  %v115 = vld [vmem:[%s0 + $0x2d8] sm:$0xff]
  %v116 = vld [vmem:[%s0 + $0x2e0] sm:$0xff]
  %v117 = vld [vmem:[%s0 + $0x2e8] sm:$0xff]
  %v118 = vld [vmem:[%s0 + $0x2f0] sm:$0xff]
  %v119 = vld [vmem:[%s0 + $0x2f8] sm:$0xff]
  %v120 = vpack.c.bf16 %v30, %v24
  %v121 = vpack.c.bf16 %v31, %v25
  %v122 = vpack.c.bf16 %v32, %v26
  %v123 = vpack.c.bf16 %v33, %v27
  %v124 = vpack.c.bf16 %v34, %v28
  %v125 = vpack.c.bf16 %v35, %v29
  %v126 = vpack.c.bf16 %v42, %v36
  %v127 = vpack.c.bf16 %v43, %v37
  %v128 = vpack.c.bf16 %v44, %v38
  %v129 = vpack.c.bf16 %v45, %v39
  %v130 = vpack.c.bf16 %v46, %v40
  %v131 = vpack.c.bf16 %v47, %v41
  %v132 = vpack.c.bf16 %v54, %v48
  %v133 = vpack.c.bf16 %v55, %v49
  %v134 = vpack.c.bf16 %v56, %v50
  %v135 = vpack.c.bf16 %v57, %v51
  %v136 = vpack.c.bf16 %v58, %v52
  %v137 = vpack.c.bf16 %v59, %v53
  %v138 = vpack.c.bf16 %v66, %v60
  %v139 = vpack.c.bf16 %v67, %v61
  %v140 = vpack.c.bf16 %v68, %v62
  %v141 = vpack.c.bf16 %v69, %v63
  %v142 = vpack.c.bf16 %v70, %v64
  %v143 = vpack.c.bf16 %v71, %v65
  %v144 = vpack.c.bf16 %v78, %v72
  %v145 = vpack.c.bf16 %v79, %v73
  %v146 = vpack.c.bf16 %v80, %v74
  %v147 = vpack.c.bf16 %v81, %v75
  %v148 = vpack.c.bf16 %v82, %v76
  %v149 = vpack.c.bf16 %v83, %v77
  %v150 = vpack.c.bf16 %v90, %v84
  %v151 = vpack.c.bf16 %v91, %v85
  %v152 = vpack.c.bf16 %v92, %v86
  %v153 = vpack.c.bf16 %v93, %v87
  %v154 = vpack.c.bf16 %v94, %v88
  %v155 = vpack.c.bf16 %v95, %v89
  %v156 = vpack.c.bf16 %v102, %v96
  %v157 = vpack.c.bf16 %v103, %v97
  %v158 = vpack.c.bf16 %v104, %v98
  %v159 = vpack.c.bf16 %v105, %v99
  %v160 = vpack.c.bf16 %v106, %v100
  %v161 = vpack.c.bf16 %v107, %v101
  %v162 = vpack.c.bf16 %v114, %v108
  %v163 = vpack.c.bf16 %v115, %v109
  %v164 = vpack.c.bf16 %v116, %v110
  %v165 = vpack.c.bf16 %v117, %v111
  %v166 = vpack.c.bf16 %v118, %v112
  %v167 = vpack.c.bf16 %v119, %v113
  %v168 = vld [vmem:[%s1] sm:$0xf]
  %v169 = vld [vmem:[%s1 + $0x4] sm:$0xf]
  %v170 = vld [vmem:[%s1 + $0x8] sm:$0xf]
  %v171 = vld [vmem:[%s1 + $0xc] sm:$0xf]
  %v172 = vld [vmem:[%s1 + $0x10] sm:$0xf]
  %v173 = vld [vmem:[%s1 + $0x14] sm:$0xf]
  %v174 = vld [vmem:[%s1 + $0x18] sm:$0xf]
  %v175 = vld [vmem:[%s1 + $0x1c] sm:$0xf]
  %v176 = vld [vmem:[%s1 + $0x20] sm:$0xf]
  %v177 = vld [vmem:[%s1 + $0x24] sm:$0xf]
  %v178 = vld [vmem:[%s1 + $0x28] sm:$0xf]
  %v179 = vld [vmem:[%s1 + $0x2c] sm:$0xf]
  %v180 = vld [vmem:[%s1 + $0x30] sm:$0xf]
  %v181 = vld [vmem:[%s1 + $0x34] sm:$0xf]
  %v182 = vld [vmem:[%s1 + $0x38] sm:$0xf]
  %v183 = vld [vmem:[%s1 + $0x3c] sm:$0xf]
  %v184 = vld [vmem:[%s1 + $0x40] sm:$0xf]
  %v185 = vld [vmem:[%s1 + $0x44] sm:$0xf]
  %v186 = vld [vmem:[%s1 + $0x48] sm:$0xf]
  %v187 = vld [vmem:[%s1 + $0x4c] sm:$0xf]
  %v188 = vld [vmem:[%s1 + $0x50] sm:$0xf]
  %v189 = vld [vmem:[%s1 + $0x54] sm:$0xf]
  %v190 = vld [vmem:[%s1 + $0x58] sm:$0xf]
  %v191 = vld [vmem:[%s1 + $0x5c] sm:$0xf]
  %v192 = vld [vmem:[%s1 + $0x60] sm:$0xf]
  %v193 = vld [vmem:[%s1 + $0x64] sm:$0xf]
  %v194 = vld [vmem:[%s1 + $0x68] sm:$0xf]
  %v195 = vld [vmem:[%s1 + $0x6c] sm:$0xf]
  %v196 = vld [vmem:[%s1 + $0x70] sm:$0xf]
  %v197 = vld [vmem:[%s1 + $0x74] sm:$0xf]
  %v198 = vld [vmem:[%s1 + $0x78] sm:$0xf]
  %v199 = vld [vmem:[%s1 + $0x7c] sm:$0xf]
  %v200 = vld [vmem:[%s1 + $0x80] sm:$0xf]
  %v201 = vld [vmem:[%s1 + $0x84] sm:$0xf]
  %v202 = vld [vmem:[%s1 + $0x88] sm:$0xf]
  %v203 = vld [vmem:[%s1 + $0x8c] sm:$0xf]
  %v204 = vld [vmem:[%s1 + $0x90] sm:$0xf]
  %v205 = vld [vmem:[%s1 + $0x94] sm:$0xf]
  %v206 = vld [vmem:[%s1 + $0x98] sm:$0xf]
  %v207 = vld [vmem:[%s1 + $0x9c] sm:$0xf]
  %v208 = vld [vmem:[%s1 + $0xa0] sm:$0xf]
  %v209 = vld [vmem:[%s1 + $0xa4] sm:$0xf]
  %v210 = vld [vmem:[%s1 + $0xa8] sm:$0xf]
  %v211 = vld [vmem:[%s1 + $0xac] sm:$0xf]
  %v212 = vld [vmem:[%s1 + $0xb0] sm:$0xf]
  %v213 = vld [vmem:[%s1 + $0xb4] sm:$0xf]
  %v214 = vld [vmem:[%s1 + $0xb8] sm:$0xf]
  %v215 = vld [vmem:[%s1 + $0xbc] sm:$0xf]
  %v216 = vld [vmem:[%s1 + $0xc0] sm:$0xf]
  %v217 = vld [vmem:[%s1 + $0xc4] sm:$0xf]
  %v218 = vld [vmem:[%s1 + $0xc8] sm:$0xf]
  %v219 = vld [vmem:[%s1 + $0xcc] sm:$0xf]
  %v220 = vld [vmem:[%s1 + $0xd0] sm:$0xf]
  %v221 = vld [vmem:[%s1 + $0xd4] sm:$0xf]
  %v222 = vld [vmem:[%s1 + $0xd8] sm:$0xf]
  %v223 = vld [vmem:[%s1 + $0xdc] sm:$0xf]
  %v224 = vld [vmem:[%s1 + $0xe0] sm:$0xf]
  %v225 = vld [vmem:[%s1 + $0xe4] sm:$0xf]
  %v226 = vld [vmem:[%s1 + $0xe8] sm:$0xf]
  %v227 = vld [vmem:[%s1 + $0xec] sm:$0xf]
  %v228 = vld [vmem:[%s1 + $0xf0] sm:$0xf]
  %v229 = vld [vmem:[%s1 + $0xf4] sm:$0xf]
  %v230 = vld [vmem:[%s1 + $0xf8] sm:$0xf]
  %v231 = vld [vmem:[%s1 + $0xfc] sm:$0xf]
  %v232 = vld [vmem:[%s1 + $0x100] sm:$0xf]
  %v233 = vld [vmem:[%s1 + $0x104] sm:$0xf]
  %v234 = vld [vmem:[%s1 + $0x108] sm:$0xf]
  %v235 = vld [vmem:[%s1 + $0x10c] sm:$0xf]
  %v236 = vld [vmem:[%s1 + $0x110] sm:$0xf]
  %v237 = vld [vmem:[%s1 + $0x114] sm:$0xf]
  %v238 = vld [vmem:[%s1 + $0x118] sm:$0xf]
  %v239 = vld [vmem:[%s1 + $0x11c] sm:$0xf]
  %v240 = vld [vmem:[%s1 + $0x120] sm:$0xf]
  %v241 = vld [vmem:[%s1 + $0x124] sm:$0xf]
  %v242 = vld [vmem:[%s1 + $0x128] sm:$0xf]
  %v243 = vld [vmem:[%s1 + $0x12c] sm:$0xf]
  %v244 = vld [vmem:[%s1 + $0x130] sm:$0xf]
  %v245 = vld [vmem:[%s1 + $0x134] sm:$0xf]
  %v246 = vld [vmem:[%s1 + $0x138] sm:$0xf]
  %v247 = vld [vmem:[%s1 + $0x13c] sm:$0xf]
  %v248 = vld [vmem:[%s1 + $0x140] sm:$0xf]
  %v249 = vld [vmem:[%s1 + $0x144] sm:$0xf]
  %v250 = vld [vmem:[%s1 + $0x148] sm:$0xf]
  %v251 = vld [vmem:[%s1 + $0x14c] sm:$0xf]
  %v252 = vld [vmem:[%s1 + $0x150] sm:$0xf]
  %v253 = vld [vmem:[%s1 + $0x154] sm:$0xf]
  %v254 = vld [vmem:[%s1 + $0x158] sm:$0xf]
  %v255 = vld [vmem:[%s1 + $0x15c] sm:$0xf]
  %v256 = vld [vmem:[%s1 + $0x160] sm:$0xf]
  %v257 = vld [vmem:[%s1 + $0x164] sm:$0xf]
  %v258 = vld [vmem:[%s1 + $0x168] sm:$0xf]
  %v259 = vld [vmem:[%s1 + $0x16c] sm:$0xf]
  %v260 = vld [vmem:[%s1 + $0x170] sm:$0xf]
  %v261 = vld [vmem:[%s1 + $0x174] sm:$0xf]
  %v262 = vld [vmem:[%s1 + $0x178] sm:$0xf]
  %v263 = vld [vmem:[%s1 + $0x17c] sm:$0xf]
  %v264 = vld [vmem:[%s5] sm:$0x1]
  %v265 = vperm.slane %v264, 0
  %v362 = vunpack.c.l.b16 %v168
  %v363 = vunpack.c.l.b16 %v169
  %v364 = vunpack.c.l.b16 %v170
  %v365 = vunpack.c.l.b16 %v171
  %v366 = vunpack.c.l.b16 %v172
  %v367 = vunpack.c.l.b16 %v173
  %v368 = vunpack.c.l.b16 %v174
  %v369 = vunpack.c.l.b16 %v175
  %v370 = vunpack.c.l.b16 %v176
  %v371 = vunpack.c.l.b16 %v177
  %v372 = vunpack.c.l.b16 %v178
  %v373 = vunpack.c.l.b16 %v179
  %v374 = vunpack.c.l.b16 %v180
  %v375 = vunpack.c.l.b16 %v181
  %v376 = vunpack.c.l.b16 %v182
  %v377 = vunpack.c.l.b16 %v183
  %v378 = vunpack.c.l.b16 %v184
  %v379 = vunpack.c.l.b16 %v185
  %v380 = vunpack.c.l.b16 %v186
  %v381 = vunpack.c.l.b16 %v187
  %v382 = vunpack.c.l.b16 %v188
  %v383 = vunpack.c.l.b16 %v189
  %v384 = vunpack.c.l.b16 %v190
  %v385 = vunpack.c.l.b16 %v191
  %v386 = vunpack.c.l.b16 %v192
  %v387 = vunpack.c.l.b16 %v193
  %v388 = vunpack.c.l.b16 %v194
  %v389 = vunpack.c.l.b16 %v195
  %v390 = vunpack.c.l.b16 %v196
  %v391 = vunpack.c.l.b16 %v197
  %v392 = vunpack.c.l.b16 %v198
  %v393 = vunpack.c.l.b16 %v199
  %v394 = vunpack.c.l.b16 %v200
  %v395 = vunpack.c.l.b16 %v201
  %v396 = vunpack.c.l.b16 %v202
  %v397 = vunpack.c.l.b16 %v203
  %v398 = vunpack.c.l.b16 %v204
  %v399 = vunpack.c.l.b16 %v205
  %v400 = vunpack.c.l.b16 %v206
  %v401 = vunpack.c.l.b16 %v207
  %v402 = vunpack.c.l.b16 %v208
  %v403 = vunpack.c.l.b16 %v209
  %v404 = vunpack.c.l.b16 %v210
  %v405 = vunpack.c.l.b16 %v211
  %v406 = vunpack.c.l.b16 %v212
  %v407 = vunpack.c.l.b16 %v213
  %v408 = vunpack.c.l.b16 %v214
  %v409 = vunpack.c.l.b16 %v215
  %v410 = vunpack.c.l.b16 %v216
  %v411 = vunpack.c.l.b16 %v217
  %v412 = vunpack.c.l.b16 %v218
  %v413 = vunpack.c.l.b16 %v219
  %v414 = vunpack.c.l.b16 %v220
  %v415 = vunpack.c.l.b16 %v221
  %v416 = vunpack.c.l.b16 %v222
  %v417 = vunpack.c.l.b16 %v223
  %v418 = vunpack.c.l.b16 %v224
  %v419 = vunpack.c.l.b16 %v225
  %v420 = vunpack.c.l.b16 %v226
  %v421 = vunpack.c.l.b16 %v227
  %v422 = vunpack.c.l.b16 %v228
  %v423 = vunpack.c.l.b16 %v229
  %v424 = vunpack.c.l.b16 %v230
  %v425 = vunpack.c.l.b16 %v231
  %v426 = vunpack.c.l.b16 %v232
  %v427 = vunpack.c.l.b16 %v233
  %v428 = vunpack.c.l.b16 %v234
  %v429 = vunpack.c.l.b16 %v235
  %v430 = vunpack.c.l.b16 %v236
  %v431 = vunpack.c.l.b16 %v237
  %v432 = vunpack.c.l.b16 %v238
  %v433 = vunpack.c.l.b16 %v239
  %v434 = vunpack.c.l.b16 %v240
  %v435 = vunpack.c.l.b16 %v241
  %v436 = vunpack.c.l.b16 %v242
  %v437 = vunpack.c.l.b16 %v243
  %v438 = vunpack.c.l.b16 %v244
  %v439 = vunpack.c.l.b16 %v245
  %v440 = vunpack.c.l.b16 %v246
  %v441 = vunpack.c.l.b16 %v247
  %v442 = vunpack.c.l.b16 %v248
  %v443 = vunpack.c.l.b16 %v249
  %v444 = vunpack.c.l.b16 %v250
  %v445 = vunpack.c.l.b16 %v251
  %v446 = vunpack.c.l.b16 %v252
  %v447 = vunpack.c.l.b16 %v253
  %v448 = vunpack.c.l.b16 %v254
  %v449 = vunpack.c.l.b16 %v255
  %v450 = vunpack.c.l.b16 %v256
  %v451 = vunpack.c.l.b16 %v257
  %v452 = vunpack.c.l.b16 %v258
  %v453 = vunpack.c.l.b16 %v259
  %v454 = vunpack.c.l.b16 %v260
  %v455 = vunpack.c.l.b16 %v261
  %v456 = vunpack.c.l.b16 %v262
  %v457 = vunpack.c.l.b16 %v263
  %v458 = vpack.c.b16 %v363, %v362
  %v459 = vpack.c.b16 %v365, %v364
  %v460 = vpack.c.b16 %v367, %v366
  %v461 = vpack.c.b16 %v369, %v368
  %v462 = vpack.c.b16 %v371, %v370
  %v463 = vpack.c.b16 %v373, %v372
  %v464 = vpack.c.b16 %v375, %v374
  %v465 = vpack.c.b16 %v377, %v376
  %v466 = vpack.c.b16 %v379, %v378
  %v467 = vpack.c.b16 %v381, %v380
  %v468 = vpack.c.b16 %v383, %v382
  %v469 = vpack.c.b16 %v385, %v384
  %v470 = vpack.c.b16 %v387, %v386
  %v471 = vpack.c.b16 %v389, %v388
  %v472 = vpack.c.b16 %v391, %v390
  %v473 = vpack.c.b16 %v393, %v392
  %v474 = vpack.c.b16 %v395, %v394
  %v475 = vpack.c.b16 %v397, %v396
  %v476 = vpack.c.b16 %v399, %v398
  %v477 = vpack.c.b16 %v401, %v400
  %v478 = vpack.c.b16 %v403, %v402
  %v479 = vpack.c.b16 %v405, %v404
  %v480 = vpack.c.b16 %v407, %v406
  %v481 = vpack.c.b16 %v409, %v408
  %v482 = vpack.c.b16 %v411, %v410
  %v483 = vpack.c.b16 %v413, %v412
  %v484 = vpack.c.b16 %v415, %v414
  %v485 = vpack.c.b16 %v417, %v416
  %v486 = vpack.c.b16 %v419, %v418
  %v487 = vpack.c.b16 %v421, %v420
  %v488 = vpack.c.b16 %v423, %v422
  %v489 = vpack.c.b16 %v425, %v424
  %v490 = vpack.c.b16 %v427, %v426
  %v491 = vpack.c.b16 %v429, %v428
  %v492 = vpack.c.b16 %v431, %v430
  %v493 = vpack.c.b16 %v433, %v432
  %v494 = vpack.c.b16 %v435, %v434
  %v495 = vpack.c.b16 %v437, %v436
  %v496 = vpack.c.b16 %v439, %v438
  %v497 = vpack.c.b16 %v441, %v440
  %v498 = vpack.c.b16 %v443, %v442
  %v499 = vpack.c.b16 %v445, %v444
  %v500 = vpack.c.b16 %v447, %v446
  %v501 = vpack.c.b16 %v449, %v448
  %v502 = vpack.c.b16 %v451, %v450
  %v503 = vpack.c.b16 %v453, %v452
  %v504 = vpack.c.b16 %v455, %v454
  %v505 = vpack.c.b16 %v457, %v456
  %554 = vmatpush.bf16.msra.mxu0 %v465
  %555 = vmatpush.bf16.msra.mxu0 %v464
  %556 = vmatpush.bf16.msra.mxu0 %v463
  %557 = vmatpush.bf16.msra.mxu0 %v462
  %558 = vmatpush.bf16.msra.mxu0 %v461
  %559 = vmatpush.bf16.msra.mxu0 %v460
  %560 = vmatpush.bf16.msra.mxu0 %v459
  %561 = vmatpush.bf16.msra.mxu0 %v458
  %562 = vmatmul.bf16.gmra.mxu0 %v120
  %v563 = vpop.f32.mrf.mxu0
  %v564 = vadd.f32 %v265, %v563
  %v565 = vpop.f32.mrf.mxu0
  %v566 = vadd.f32 %v265, %v565
  %567 = vmatmul.bf16.gmra.mxu0 %v126
  %v568 = vpop.f32.mrf.mxu0
  %v569 = vadd.f32 %v265, %v568
  %v570 = vpop.f32.mrf.mxu0
  %v571 = vadd.f32 %v265, %v570
  %572 = vmatmul.bf16.gmra.mxu0 %v132
  %v573 = vpop.f32.mrf.mxu0
  %v574 = vadd.f32 %v265, %v573
  %v575 = vpop.f32.mrf.mxu0
  %v576 = vadd.f32 %v265, %v575
  %577 = vmatmul.bf16.gmra.mxu0 %v138
  %v578 = vpop.f32.mrf.mxu0
  %v579 = vadd.f32 %v265, %v578
  %v580 = vpop.f32.mrf.mxu0
  %v581 = vadd.f32 %v265, %v580
  %582 = vmatmul.bf16.gmra.mxu0 %v144
  %v583 = vpop.f32.mrf.mxu0
  %v584 = vadd.f32 %v265, %v583
  %v585 = vpop.f32.mrf.mxu0
  %v586 = vadd.f32 %v265, %v585
  %587 = vmatmul.bf16.gmra.mxu0 %v150
  %v588 = vpop.f32.mrf.mxu0
  %v589 = vadd.f32 %v265, %v588
  %v590 = vpop.f32.mrf.mxu0
  %v591 = vadd.f32 %v265, %v590
  %592 = vmatmul.bf16.gmra.mxu0 %v156
  %v593 = vpop.f32.mrf.mxu0
  %v594 = vadd.f32 %v265, %v593
  %v595 = vpop.f32.mrf.mxu0
  %v596 = vadd.f32 %v265, %v595
  %597 = vmatmul.bf16.gmra.mxu0 %v162
  %v598 = vpop.f32.mrf.mxu0
  %v599 = vadd.f32 %v265, %v598
  %v600 = vpop.f32.mrf.mxu0
  %v601 = vadd.f32 %v265, %v600
  %602 = vdwg.mxu0
  %603 = vmatpush.bf16.msra.mxu0 %v473
  %604 = vmatpush.bf16.msra.mxu0 %v472
  %605 = vmatpush.bf16.msra.mxu0 %v471
  %606 = vmatpush.bf16.msra.mxu0 %v470
  %607 = vmatpush.bf16.msra.mxu0 %v469
  %608 = vmatpush.bf16.msra.mxu0 %v468
  %609 = vmatpush.bf16.msra.mxu0 %v467
  %610 = vmatpush.bf16.msra.mxu0 %v466
  %611 = vmatmul.bf16.gmra.mxu0 %v121
  %v612 = vpop.f32.mrf.mxu0
  %v613 = vadd.f32 %v564, %v612
  %v614 = vpop.f32.mrf.mxu0
  %v615 = vadd.f32 %v566, %v614
  %616 = vmatmul.bf16.gmra.mxu0 %v127
  %v617 = vpop.f32.mrf.mxu0
  %v618 = vadd.f32 %v569, %v617
  %v619 = vpop.f32.mrf.mxu0
  %v620 = vadd.f32 %v571, %v619
  %621 = vmatmul.bf16.gmra.mxu0 %v133
  %v622 = vpop.f32.mrf.mxu0
  %v623 = vadd.f32 %v574, %v622
  %v624 = vpop.f32.mrf.mxu0
  %v625 = vadd.f32 %v576, %v624
  %626 = vmatmul.bf16.gmra.mxu0 %v139
  %v627 = vpop.f32.mrf.mxu0
  %v628 = vadd.f32 %v579, %v627
  %v629 = vpop.f32.mrf.mxu0
  %v630 = vadd.f32 %v581, %v629
  %631 = vmatmul.bf16.gmra.mxu0 %v145
  %v632 = vpop.f32.mrf.mxu0
  %v633 = vadd.f32 %v584, %v632
  %v634 = vpop.f32.mrf.mxu0
  %v635 = vadd.f32 %v586, %v634
  %636 = vmatmul.bf16.gmra.mxu0 %v151
  %v637 = vpop.f32.mrf.mxu0
  %v638 = vadd.f32 %v589, %v637
  %v639 = vpop.f32.mrf.mxu0
  %v640 = vadd.f32 %v591, %v639
  %641 = vmatmul.bf16.gmra.mxu0 %v157
  %v642 = vpop.f32.mrf.mxu0
  %v643 = vadd.f32 %v594, %v642
  %v644 = vpop.f32.mrf.mxu0
  %v645 = vadd.f32 %v596, %v644
  %646 = vmatmul.bf16.gmra.mxu0 %v163
  %v647 = vpop.f32.mrf.mxu0
  %v648 = vadd.f32 %v599, %v647
  %v649 = vpop.f32.mrf.mxu0
  %v650 = vadd.f32 %v601, %v649
  %651 = vdwg.mxu0
  %652 = vmatpush.bf16.msra.mxu0 %v481
  %653 = vmatpush.bf16.msra.mxu0 %v480
  %654 = vmatpush.bf16.msra.mxu0 %v479
  %655 = vmatpush.bf16.msra.mxu0 %v478
  %656 = vmatpush.bf16.msra.mxu0 %v477
  %657 = vmatpush.bf16.msra.mxu0 %v476
  %658 = vmatpush.bf16.msra.mxu0 %v475
  %659 = vmatpush.bf16.msra.mxu0 %v474
  %660 = vmatmul.bf16.gmra.mxu0 %v122
  %v661 = vpop.f32.mrf.mxu0
  %v662 = vadd.f32 %v613, %v661
  %v663 = vpop.f32.mrf.mxu0
  %v664 = vadd.f32 %v615, %v663
  %665 = vmatmul.bf16.gmra.mxu0 %v128
  %v666 = vpop.f32.mrf.mxu0
  %v667 = vadd.f32 %v618, %v666
  %v668 = vpop.f32.mrf.mxu0
  %v669 = vadd.f32 %v620, %v668
  %670 = vmatmul.bf16.gmra.mxu0 %v134
  %v671 = vpop.f32.mrf.mxu0
  %v672 = vadd.f32 %v623, %v671
  %v673 = vpop.f32.mrf.mxu0
  %v674 = vadd.f32 %v625, %v673
  %675 = vmatmul.bf16.gmra.mxu0 %v140
  %v676 = vpop.f32.mrf.mxu0
  %v677 = vadd.f32 %v628, %v676
  %v678 = vpop.f32.mrf.mxu0
  %v679 = vadd.f32 %v630, %v678
  %680 = vmatmul.bf16.gmra.mxu0 %v146
  %v681 = vpop.f32.mrf.mxu0
  %v682 = vadd.f32 %v633, %v681
  %v683 = vpop.f32.mrf.mxu0
  %v684 = vadd.f32 %v635, %v683
  %685 = vmatmul.bf16.gmra.mxu0 %v152
  %v686 = vpop.f32.mrf.mxu0
  %v687 = vadd.f32 %v638, %v686
  %v688 = vpop.f32.mrf.mxu0
  %v689 = vadd.f32 %v640, %v688
  %690 = vmatmul.bf16.gmra.mxu0 %v158
  %v691 = vpop.f32.mrf.mxu0
  %v692 = vadd.f32 %v643, %v691
  %v693 = vpop.f32.mrf.mxu0
  %v694 = vadd.f32 %v645, %v693
  %695 = vmatmul.bf16.gmra.mxu0 %v164
  %v696 = vpop.f32.mrf.mxu0
  %v697 = vadd.f32 %v648, %v696
  %v698 = vpop.f32.mrf.mxu0
  %v699 = vadd.f32 %v650, %v698
  %700 = vdwg.mxu0
  %701 = vmatpush.bf16.msra.mxu0 %v489
  %702 = vmatpush.bf16.msra.mxu0 %v488
  %703 = vmatpush.bf16.msra.mxu0 %v487
  %704 = vmatpush.bf16.msra.mxu0 %v486
  %705 = vmatpush.bf16.msra.mxu0 %v485
  %706 = vmatpush.bf16.msra.mxu0 %v484
  %707 = vmatpush.bf16.msra.mxu0 %v483
  %708 = vmatpush.bf16.msra.mxu0 %v482
  %709 = vmatmul.bf16.gmra.mxu0 %v123
  %v710 = vpop.f32.mrf.mxu0
  %v711 = vadd.f32 %v662, %v710
  %v712 = vpop.f32.mrf.mxu0
  %v713 = vadd.f32 %v664, %v712
  %714 = vmatmul.bf16.gmra.mxu0 %v129
  %v715 = vpop.f32.mrf.mxu0
  %v716 = vadd.f32 %v667, %v715
  %v717 = vpop.f32.mrf.mxu0
  %v718 = vadd.f32 %v669, %v717
  %719 = vmatmul.bf16.gmra.mxu0 %v135
  %v720 = vpop.f32.mrf.mxu0
  %v721 = vadd.f32 %v672, %v720
  %v722 = vpop.f32.mrf.mxu0
  %v723 = vadd.f32 %v674, %v722
  %724 = vmatmul.bf16.gmra.mxu0 %v141
  %v725 = vpop.f32.mrf.mxu0
  %v726 = vadd.f32 %v677, %v725
  %v727 = vpop.f32.mrf.mxu0
  %v728 = vadd.f32 %v679, %v727
  %729 = vmatmul.bf16.gmra.mxu0 %v147
  %v730 = vpop.f32.mrf.mxu0
  %v731 = vadd.f32 %v682, %v730
  %v732 = vpop.f32.mrf.mxu0
  %v733 = vadd.f32 %v684, %v732
  %734 = vmatmul.bf16.gmra.mxu0 %v153
  %v735 = vpop.f32.mrf.mxu0
  %v736 = vadd.f32 %v687, %v735
  %v737 = vpop.f32.mrf.mxu0
  %v738 = vadd.f32 %v689, %v737
  %739 = vmatmul.bf16.gmra.mxu0 %v159
  %v740 = vpop.f32.mrf.mxu0
  %v741 = vadd.f32 %v692, %v740
  %v742 = vpop.f32.mrf.mxu0
  %v743 = vadd.f32 %v694, %v742
  %744 = vmatmul.bf16.gmra.mxu0 %v165
  %v745 = vpop.f32.mrf.mxu0
  %v746 = vadd.f32 %v697, %v745
  %v747 = vpop.f32.mrf.mxu0
  %v748 = vadd.f32 %v699, %v747
  %749 = vdwg.mxu0
  %750 = vmatpush.bf16.msra.mxu0 %v497
  %751 = vmatpush.bf16.msra.mxu0 %v496
  %752 = vmatpush.bf16.msra.mxu0 %v495
  %753 = vmatpush.bf16.msra.mxu0 %v494
  %754 = vmatpush.bf16.msra.mxu0 %v493
  %755 = vmatpush.bf16.msra.mxu0 %v492
  %756 = vmatpush.bf16.msra.mxu0 %v491
  %757 = vmatpush.bf16.msra.mxu0 %v490
  %758 = vmatmul.bf16.gmra.mxu0 %v124
  %v759 = vpop.f32.mrf.mxu0
  %v760 = vadd.f32 %v711, %v759
  %v761 = vpop.f32.mrf.mxu0
  %v762 = vadd.f32 %v713, %v761
  %763 = vmatmul.bf16.gmra.mxu0 %v130
  %v764 = vpop.f32.mrf.mxu0
  %v765 = vadd.f32 %v716, %v764
  %v766 = vpop.f32.mrf.mxu0
  %v767 = vadd.f32 %v718, %v766
  %768 = vmatmul.bf16.gmra.mxu0 %v136
  %v769 = vpop.f32.mrf.mxu0
  %v770 = vadd.f32 %v721, %v769
  %v771 = vpop.f32.mrf.mxu0
  %v772 = vadd.f32 %v723, %v771
  %773 = vmatmul.bf16.gmra.mxu0 %v142
  %v774 = vpop.f32.mrf.mxu0
  %v775 = vadd.f32 %v726, %v774
  %v776 = vpop.f32.mrf.mxu0
  %v777 = vadd.f32 %v728, %v776
  %778 = vmatmul.bf16.gmra.mxu0 %v148
  %v779 = vpop.f32.mrf.mxu0
  %v780 = vadd.f32 %v731, %v779
  %v781 = vpop.f32.mrf.mxu0
  %v782 = vadd.f32 %v733, %v781
  %783 = vmatmul.bf16.gmra.mxu0 %v154
  %v784 = vpop.f32.mrf.mxu0
  %v785 = vadd.f32 %v736, %v784
  %v786 = vpop.f32.mrf.mxu0
  %v787 = vadd.f32 %v738, %v786
  %788 = vmatmul.bf16.gmra.mxu0 %v160
  %v789 = vpop.f32.mrf.mxu0
  %v790 = vadd.f32 %v741, %v789
  %v791 = vpop.f32.mrf.mxu0
  %v792 = vadd.f32 %v743, %v791
  %793 = vmatmul.bf16.gmra.mxu0 %v166
  %v794 = vpop.f32.mrf.mxu0
  %v795 = vadd.f32 %v746, %v794
  %v796 = vpop.f32.mrf.mxu0
  %v797 = vadd.f32 %v748, %v796
  %798 = vdwg.mxu0
  %799 = vmatpush.bf16.msra.mxu0 %v505
  %800 = vmatpush.bf16.msra.mxu0 %v504
  %801 = vmatpush.bf16.msra.mxu0 %v503
  %802 = vmatpush.bf16.msra.mxu0 %v502
  %803 = vmatpush.bf16.msra.mxu0 %v501
  %804 = vmatpush.bf16.msra.mxu0 %v500
  %805 = vmatpush.bf16.msra.mxu0 %v499
  %806 = vmatpush.bf16.msra.mxu0 %v498
  %807 = vmatmul.bf16.gmra.mxu0 %v125
  %v808 = vpop.f32.mrf.mxu0
  %v809 = vadd.f32 %v760, %v808
  %v810 = vpop.f32.mrf.mxu0
  %v811 = vadd.f32 %v762, %v810
  %812 = vmatmul.bf16.gmra.mxu0 %v131
  %v813 = vpop.f32.mrf.mxu0
  %v814 = vadd.f32 %v765, %v813
  %v815 = vpop.f32.mrf.mxu0
  %v816 = vadd.f32 %v767, %v815
  %817 = vmatmul.bf16.gmra.mxu0 %v137
  %v818 = vpop.f32.mrf.mxu0
  %v819 = vadd.f32 %v770, %v818
  %v820 = vpop.f32.mrf.mxu0
  %v821 = vadd.f32 %v772, %v820
  %822 = vmatmul.bf16.gmra.mxu0 %v143
  %v823 = vpop.f32.mrf.mxu0
  %v824 = vadd.f32 %v775, %v823
  %v825 = vpop.f32.mrf.mxu0
  %v826 = vadd.f32 %v777, %v825
  %827 = vmatmul.bf16.gmra.mxu0 %v149
  %v828 = vpop.f32.mrf.mxu0
  %v829 = vadd.f32 %v780, %v828
  %v830 = vpop.f32.mrf.mxu0
  %v831 = vadd.f32 %v782, %v830
  %832 = vmatmul.bf16.gmra.mxu0 %v155
  %v833 = vpop.f32.mrf.mxu0
  %v834 = vadd.f32 %v785, %v833
  %v835 = vpop.f32.mrf.mxu0
  %v836 = vadd.f32 %v787, %v835
  %837 = vmatmul.bf16.gmra.mxu0 %v161
  %v838 = vpop.f32.mrf.mxu0
  %v839 = vadd.f32 %v790, %v838
  %v840 = vpop.f32.mrf.mxu0
  %v841 = vadd.f32 %v792, %v840
  %842 = vmatmul.bf16.gmra.mxu0 %v167
  %v843 = vpop.f32.mrf.mxu0
  %v844 = vadd.f32 %v795, %v843
  %v845 = vpop.f32.mrf.mxu0
  %v846 = vadd.f32 %v797, %v845
  %847 = vdwg.mxu0
  %v848 = vld [vmem:[%s2] sm:$0xff]
  %v849 = vld [vmem:[%s2 + $0x8] sm:$0xf]
  %v850 = vld [vmem:[%s2 + $0xc] sm:$0xff]
  %v851 = vld [vmem:[%s2 + $0x14] sm:$0xf]
  %v852 = vld [vmem:[%s2 + $0x18] sm:$0xff]
  %v853 = vld [vmem:[%s2 + $0x20] sm:$0xf]
  %v854 = vld [vmem:[%s2 + $0x24] sm:$0xff]
  %v855 = vld [vmem:[%s2 + $0x2c] sm:$0xf]
  %v864 = vunpack.c.l.b16 %v848
  %v865 = vunpack.c.h.b16 %v848
  %v866 = vunpack.c.l.b16 %v849
  %v867 = vunpack.c.l.b16 %v850
  %v868 = vunpack.c.h.b16 %v850
  %v869 = vunpack.c.l.b16 %v851
  %v870 = vunpack.c.l.b16 %v852
  %v871 = vunpack.c.h.b16 %v852
  %v872 = vunpack.c.l.b16 %v853
  %v873 = vunpack.c.l.b16 %v854
  %v874 = vunpack.c.h.b16 %v854
  %v875 = vunpack.c.l.b16 %v855
  %v876 = vpack.c.b16 %v867, %v864
  %v877 = vpack.c.b16 %v868, %v865
  %v878 = vpack.c.b16 %v869, %v866
  %v879 = vpack.c.b16 %v873, %v870
  %v880 = vpack.c.b16 %v874, %v871
  %v881 = vpack.c.b16 %v875, %v872
  %vm888 = vcmask 261120
  %v890 = vsel %vm888, %v809, 0
  %v893 = vsel %vm888, %v811, 0
  %v896 = vsel %vm888, %v814, 0
  %v899 = vsel %vm888, %v816, 0
  %v902 = vsel %vm888, %v819, 0
  %v905 = vsel %vm888, %v821, 0
  %v908 = vsel %vm888, %v824, 0
  %v911 = vsel %vm888, %v826, 0
  %v914 = vsel %vm888, %v829, 0
  %v917 = vsel %vm888, %v831, 0
  %v920 = vsel %vm888, %v834, 0
  %v923 = vsel %vm888, %v836, 0
  %v926 = vsel %vm888, %v839, 0
  %v929 = vsel %vm888, %v841, 0
  %v932 = vsel %vm888, %v844, 0
  %v935 = vsel %vm888, %v846, 0
  %937 = vmatpush.bf16.msra.mxu0 0
  %938 = vmatpush.bf16.msra.mxu0 0
  %939 = vmatpush.bf16.msra.mxu0 0
  %940 = vmatpush.bf16.msra.mxu0 0
  %941 = vmatpush.bf16.msra.mxu0 0
  %942 = vmatpush.bf16.msra.mxu0 0
  %943 = vmatpush.bf16.msra.mxu0 %v879
  %944 = vmatpush.bf16.msra.mxu0 %v876
  %945 = vmatmul.f32.gmra.mxu0 %v890
  %v946 = vpop.f32.mrf.mxu0
  %v947 = vadd.f32 0.0, %v946
  %948 = vmatmul.f32.gmra.mxu0 %v893
  %v949 = vpop.f32.mrf.mxu0
  %v950 = vadd.f32 0.0, %v949
  %951 = vmatmul.f32.gmra.mxu0 %v896
  %v952 = vpop.f32.mrf.mxu0
  %v953 = vadd.f32 0.0, %v952
  %954 = vmatmul.f32.gmra.mxu0 %v899
  %v955 = vpop.f32.mrf.mxu0
  %v956 = vadd.f32 0.0, %v955
  %957 = vmatmul.f32.gmra.mxu0 %v902
  %v958 = vpop.f32.mrf.mxu0
  %v959 = vadd.f32 0.0, %v958
  %960 = vmatmul.f32.gmra.mxu0 %v905
  %v961 = vpop.f32.mrf.mxu0
  %v962 = vadd.f32 0.0, %v961
  %963 = vmatmul.f32.gmra.mxu0 %v908
  %v964 = vpop.f32.mrf.mxu0
  %v965 = vadd.f32 0.0, %v964
  %966 = vmatmul.f32.gmra.mxu0 %v911
  %v967 = vpop.f32.mrf.mxu0
  %v968 = vadd.f32 0.0, %v967
  %969 = vmatmul.f32.gmra.mxu0 %v914
  %v970 = vpop.f32.mrf.mxu0
  %v971 = vadd.f32 0.0, %v970
  %972 = vmatmul.f32.gmra.mxu0 %v917
  %v973 = vpop.f32.mrf.mxu0
  %v974 = vadd.f32 0.0, %v973
  %975 = vmatmul.f32.gmra.mxu0 %v920
  %v976 = vpop.f32.mrf.mxu0
  %v977 = vadd.f32 0.0, %v976
  %978 = vmatmul.f32.gmra.mxu0 %v923
  %v979 = vpop.f32.mrf.mxu0
  %v980 = vadd.f32 0.0, %v979
  %981 = vmatmul.f32.gmra.mxu0 %v926
  %v982 = vpop.f32.mrf.mxu0
  %v983 = vadd.f32 0.0, %v982
  %984 = vmatmul.f32.gmra.mxu0 %v929
  %v985 = vpop.f32.mrf.mxu0
  %v986 = vadd.f32 0.0, %v985
  %987 = vmatmul.f32.gmra.mxu0 %v932
  %v988 = vpop.f32.mrf.mxu0
  %v989 = vadd.f32 0.0, %v988
  %990 = vmatmul.f32.gmra.mxu0 %v935
  %v991 = vpop.f32.mrf.mxu0
  %v992 = vadd.f32 0.0, %v991
  %993 = vdwg.mxu0
  %994 = vmatpush.bf16.msra.mxu0 0
  %995 = vmatpush.bf16.msra.mxu0 0
  %996 = vmatpush.bf16.msra.mxu0 0
  %997 = vmatpush.bf16.msra.mxu0 0
  %998 = vmatpush.bf16.msra.mxu0 0
  %999 = vmatpush.bf16.msra.mxu0 0
  %1000 = vmatpush.bf16.msra.mxu0 %v880
  %1001 = vmatpush.bf16.msra.mxu0 %v877
  %1002 = vmatmul.f32.gmra.mxu0 %v890
  %v1003 = vpop.f32.mrf.mxu0
  %v1004 = vadd.f32 0.0, %v1003
  %1005 = vmatmul.f32.gmra.mxu0 %v893
  %v1006 = vpop.f32.mrf.mxu0
  %v1007 = vadd.f32 0.0, %v1006
  %1008 = vmatmul.f32.gmra.mxu0 %v896
  %v1009 = vpop.f32.mrf.mxu0
  %v1010 = vadd.f32 0.0, %v1009
  %1011 = vmatmul.f32.gmra.mxu0 %v899
  %v1012 = vpop.f32.mrf.mxu0
  %v1013 = vadd.f32 0.0, %v1012
  %1014 = vmatmul.f32.gmra.mxu0 %v902
  %v1015 = vpop.f32.mrf.mxu0
  %v1016 = vadd.f32 0.0, %v1015
  %1017 = vmatmul.f32.gmra.mxu0 %v905
  %v1018 = vpop.f32.mrf.mxu0
  %v1019 = vadd.f32 0.0, %v1018
  %1020 = vmatmul.f32.gmra.mxu0 %v908
  %v1021 = vpop.f32.mrf.mxu0
  %v1022 = vadd.f32 0.0, %v1021
  %1023 = vmatmul.f32.gmra.mxu0 %v911
  %v1024 = vpop.f32.mrf.mxu0
  %v1025 = vadd.f32 0.0, %v1024
  %1026 = vmatmul.f32.gmra.mxu0 %v914
  %v1027 = vpop.f32.mrf.mxu0
  %v1028 = vadd.f32 0.0, %v1027
  %1029 = vmatmul.f32.gmra.mxu0 %v917
  %v1030 = vpop.f32.mrf.mxu0
  %v1031 = vadd.f32 0.0, %v1030
  %1032 = vmatmul.f32.gmra.mxu0 %v920
  %v1033 = vpop.f32.mrf.mxu0
  %v1034 = vadd.f32 0.0, %v1033
  %1035 = vmatmul.f32.gmra.mxu0 %v923
  %v1036 = vpop.f32.mrf.mxu0
  %v1037 = vadd.f32 0.0, %v1036
  %1038 = vmatmul.f32.gmra.mxu0 %v926
  %v1039 = vpop.f32.mrf.mxu0
  %v1040 = vadd.f32 0.0, %v1039
  %1041 = vmatmul.f32.gmra.mxu0 %v929
  %v1042 = vpop.f32.mrf.mxu0
  %v1043 = vadd.f32 0.0, %v1042
  %1044 = vmatmul.f32.gmra.mxu0 %v932
  %v1045 = vpop.f32.mrf.mxu0
  %v1046 = vadd.f32 0.0, %v1045
  %1047 = vmatmul.f32.gmra.mxu0 %v935
  %v1048 = vpop.f32.mrf.mxu0
  %v1049 = vadd.f32 0.0, %v1048
  %1050 = vdwg.mxu0
  %1051 = vmatpush.bf16.msra.mxu0 0
  %1052 = vmatpush.bf16.msra.mxu0 0
  %1053 = vmatpush.bf16.msra.mxu0 0
  %1054 = vmatpush.bf16.msra.mxu0 0
  %1055 = vmatpush.bf16.msra.mxu0 0
  %1056 = vmatpush.bf16.msra.mxu0 0
  %1057 = vmatpush.bf16.msra.mxu0 %v881
  %1058 = vmatpush.bf16.msra.mxu0 %v878
  %1059 = vmatmul.f32.gmra.mxu0 %v890
  %v1060 = vpop.f32.mrf.mxu0
  %v1061 = vadd.f32 0.0, %v1060
  %1062 = vmatmul.f32.gmra.mxu0 %v893
  %v1063 = vpop.f32.mrf.mxu0
  %v1064 = vadd.f32 0.0, %v1063
  %1065 = vmatmul.f32.gmra.mxu0 %v896
  %v1066 = vpop.f32.mrf.mxu0
  %v1067 = vadd.f32 0.0, %v1066
  %1068 = vmatmul.f32.gmra.mxu0 %v899
  %v1069 = vpop.f32.mrf.mxu0
  %v1070 = vadd.f32 0.0, %v1069
  %1071 = vmatmul.f32.gmra.mxu0 %v902
  %v1072 = vpop.f32.mrf.mxu0
  %v1073 = vadd.f32 0.0, %v1072
  %1074 = vmatmul.f32.gmra.mxu0 %v905
  %v1075 = vpop.f32.mrf.mxu0
  %v1076 = vadd.f32 0.0, %v1075
  %1077 = vmatmul.f32.gmra.mxu0 %v908
  %v1078 = vpop.f32.mrf.mxu0
  %v1079 = vadd.f32 0.0, %v1078
  %1080 = vmatmul.f32.gmra.mxu0 %v911
  %v1081 = vpop.f32.mrf.mxu0
  %v1082 = vadd.f32 0.0, %v1081
  %1083 = vmatmul.f32.gmra.mxu0 %v914
  %v1084 = vpop.f32.mrf.mxu0
  %v1085 = vadd.f32 0.0, %v1084
  %1086 = vmatmul.f32.gmra.mxu0 %v917
  %v1087 = vpop.f32.mrf.mxu0
  %v1088 = vadd.f32 0.0, %v1087
  %1089 = vmatmul.f32.gmra.mxu0 %v920
  %v1090 = vpop.f32.mrf.mxu0
  %v1091 = vadd.f32 0.0, %v1090
  %1092 = vmatmul.f32.gmra.mxu0 %v923
  %v1093 = vpop.f32.mrf.mxu0
  %v1094 = vadd.f32 0.0, %v1093
  %1095 = vmatmul.f32.gmra.mxu0 %v926
  %v1096 = vpop.f32.mrf.mxu0
  %v1097 = vadd.f32 0.0, %v1096
  %1098 = vmatmul.f32.gmra.mxu0 %v929
  %v1099 = vpop.f32.mrf.mxu0
  %v1100 = vadd.f32 0.0, %v1099
  %1101 = vmatmul.f32.gmra.mxu0 %v932
  %v1102 = vpop.f32.mrf.mxu0
  %v1103 = vadd.f32 0.0, %v1102
  %1104 = vmatmul.f32.gmra.mxu0 %v935
  %v1105 = vpop.f32.mrf.mxu0
  %v1106 = vadd.f32 0.0, %v1105
  %1107 = vdwg.mxu0
  %v1108 = vlaneseq
  %v1109 = vshrl.u32 %v1108, 7
  %v1110 = vadd.s32 %v1109, 8
  %v1111 = vadd.s32 %v1109, 16
  %v1112 = vadd.s32 %v1109, 24
  %v1113 = vadd.s32 %v1109, 32
  %v1114 = vadd.s32 %v1109, 40
  %v1115 = vadd.s32 %v1109, 48
  %v1116 = vadd.s32 %v1109, 56
  %v1117 = vadd.s32 %v1109, 64
  %v1118 = vadd.s32 %v1109, 72
  %v1119 = vadd.s32 %v1109, 80
  %v1120 = vadd.s32 %v1109, 88
  %v1121 = vadd.s32 %v1109, 96
  %v1122 = vadd.s32 %v1109, 104
  %v1123 = vadd.s32 %v1109, 112
  %v1124 = vadd.s32 %v1109, 120
  %v1125 = vand.u32 %v1109, 7
  %v1126 = vand.u32 %v1110, 7
  %v1127 = vand.u32 %v1111, 7
  %v1128 = vand.u32 %v1112, 7
  %v1129 = vand.u32 %v1113, 7
  %v1130 = vand.u32 %v1114, 7
  %v1131 = vand.u32 %v1115, 7
  %v1132 = vand.u32 %v1116, 7
  %v1133 = vand.u32 %v1117, 7
  %v1134 = vand.u32 %v1118, 7
  %v1135 = vand.u32 %v1119, 7
  %v1136 = vand.u32 %v1120, 7
  %v1137 = vand.u32 %v1121, 7
  %v1138 = vand.u32 %v1122, 7
  %v1139 = vand.u32 %v1123, 7
  %v1140 = vand.u32 %v1124, 7
  %vm1141 = vcmp.ne.s32.totalorder %v1125, 0
  %vm1142 = vcmp.ne.s32.totalorder %v1126, 0
  %vm1143 = vcmp.ne.s32.totalorder %v1127, 0
  %vm1144 = vcmp.ne.s32.totalorder %v1128, 0
  %vm1145 = vcmp.ne.s32.totalorder %v1129, 0
  %vm1146 = vcmp.ne.s32.totalorder %v1130, 0
  %vm1147 = vcmp.ne.s32.totalorder %v1131, 0
  %vm1148 = vcmp.ne.s32.totalorder %v1132, 0
  %vm1149 = vcmp.ne.s32.totalorder %v1133, 0
  %vm1150 = vcmp.ne.s32.totalorder %v1134, 0
  %vm1151 = vcmp.ne.s32.totalorder %v1135, 0
  %vm1152 = vcmp.ne.s32.totalorder %v1136, 0
  %vm1153 = vcmp.ne.s32.totalorder %v1137, 0
  %vm1154 = vcmp.ne.s32.totalorder %v1138, 0
  %vm1155 = vcmp.ne.s32.totalorder %v1139, 0
  %vm1156 = vcmp.ne.s32.totalorder %v1140, 0
  %v1157 = vrot.slane %v947, 7
  %v1158 = vrot.slane %v950, 7
  %v1159 = vrot.slane %v953, 7
  %v1160 = vrot.slane %v956, 7
  %v1161 = vrot.slane %v959, 7
  %v1162 = vrot.slane %v962, 7
  %v1163 = vrot.slane %v965, 7
  %v1164 = vrot.slane %v968, 7
  %v1165 = vrot.slane %v971, 7
  %v1166 = vrot.slane %v974, 7
  %v1167 = vrot.slane %v977, 7
  %v1168 = vrot.slane %v980, 7
  %v1169 = vrot.slane %v983, 7
  %v1170 = vrot.slane %v986, 7
  %v1171 = vrot.slane %v989, 7
  %v1172 = vrot.slane %v992, 7
  %vm1173 = vcmp.lt.s32.totalorder %v1109, 1
  %v1174 = vsel %vm1173, %v1171, %v1172
  %v1175 = vsel %vm1173, %v1170, %v1171
  %v1176 = vsel %vm1173, %v1169, %v1170
  %v1177 = vsel %vm1173, %v1168, %v1169
  %v1178 = vsel %vm1173, %v1167, %v1168
  %v1179 = vsel %vm1173, %v1166, %v1167
  %v1180 = vsel %vm1173, %v1165, %v1166
  %v1181 = vsel %vm1173, %v1164, %v1165
  %v1182 = vsel %vm1173, %v1163, %v1164
  %v1183 = vsel %vm1173, %v1162, %v1163
  %v1184 = vsel %vm1173, %v1161, %v1162
  %v1185 = vsel %vm1173, %v1160, %v1161
  %v1186 = vsel %vm1173, %v1159, %v1160
  %v1187 = vsel %vm1173, %v1158, %v1159
  %v1188 = vsel %vm1173, %v1157, %v1158
  %v1189 = vsel %vm1173, %v1172, %v1157
  %v1190 = vsel %vm1141, %v1189, 0.0
  %v1191 = vsel %vm1142, %v1188, 0.0
  %v1192 = vsel %vm1143, %v1187, 0.0
  %v1193 = vsel %vm1144, %v1186, 0.0
  %v1194 = vsel %vm1145, %v1185, 0.0
  %v1195 = vsel %vm1146, %v1184, 0.0
  %v1196 = vsel %vm1147, %v1183, 0.0
  %v1197 = vsel %vm1148, %v1182, 0.0
  %v1198 = vsel %vm1149, %v1181, 0.0
  %v1199 = vsel %vm1150, %v1180, 0.0
  %v1200 = vsel %vm1151, %v1179, 0.0
  %v1201 = vsel %vm1152, %v1178, 0.0
  %v1202 = vsel %vm1153, %v1177, 0.0
  %v1203 = vsel %vm1154, %v1176, 0.0
  %v1204 = vsel %vm1155, %v1175, 0.0
  %v1205 = vsel %vm1156, %v1174, 0.0
  %vm1206 = vcmp.ne.s32.totalorder %v1125, 7
  %vm1207 = vcmp.ne.s32.totalorder %v1126, 7
  %vm1208 = vcmp.ne.s32.totalorder %v1127, 7
  %vm1209 = vcmp.ne.s32.totalorder %v1128, 7
  %vm1210 = vcmp.ne.s32.totalorder %v1129, 7
  %vm1211 = vcmp.ne.s32.totalorder %v1130, 7
  %vm1212 = vcmp.ne.s32.totalorder %v1131, 7
  %vm1213 = vcmp.ne.s32.totalorder %v1132, 7
  %vm1214 = vcmp.ne.s32.totalorder %v1133, 7
  %vm1215 = vcmp.ne.s32.totalorder %v1134, 7
  %vm1216 = vcmp.ne.s32.totalorder %v1135, 7
  %vm1217 = vcmp.ne.s32.totalorder %v1136, 7
  %vm1218 = vcmp.ne.s32.totalorder %v1137, 7
  %vm1219 = vcmp.ne.s32.totalorder %v1138, 7
  %vm1220 = vcmp.ne.s32.totalorder %v1139, 7
  %vm1221 = vcmp.ne.s32.totalorder %v1140, 7
  %v1222 = vrot.slane %v1061, 1
  %v1223 = vrot.slane %v1064, 1
  %v1224 = vrot.slane %v1067, 1
  %v1225 = vrot.slane %v1070, 1
  %v1226 = vrot.slane %v1073, 1
  %v1227 = vrot.slane %v1076, 1
  %v1228 = vrot.slane %v1079, 1
  %v1229 = vrot.slane %v1082, 1
  %v1230 = vrot.slane %v1085, 1
  %v1231 = vrot.slane %v1088, 1
  %v1232 = vrot.slane %v1091, 1
  %v1233 = vrot.slane %v1094, 1
  %v1234 = vrot.slane %v1097, 1
  %v1235 = vrot.slane %v1100, 1
  %v1236 = vrot.slane %v1103, 1
  %v1237 = vrot.slane %v1106, 1
  %vm1238 = vcmp.lt.s32.totalorder %v1109, 7
  %v1239 = vsel %vm1238, %v1236, %v1237
  %v1240 = vsel %vm1238, %v1235, %v1236
  %v1241 = vsel %vm1238, %v1234, %v1235
  %v1242 = vsel %vm1238, %v1233, %v1234
  %v1243 = vsel %vm1238, %v1232, %v1233
  %v1244 = vsel %vm1238, %v1231, %v1232
  %v1245 = vsel %vm1238, %v1230, %v1231
  %v1246 = vsel %vm1238, %v1229, %v1230
  %v1247 = vsel %vm1238, %v1228, %v1229
  %v1248 = vsel %vm1238, %v1227, %v1228
  %v1249 = vsel %vm1238, %v1226, %v1227
  %v1250 = vsel %vm1238, %v1225, %v1226
  %v1251 = vsel %vm1238, %v1224, %v1225
  %v1252 = vsel %vm1238, %v1223, %v1224
  %v1253 = vsel %vm1238, %v1222, %v1223
  %v1254 = vsel %vm1238, %v1237, %v1222
  %v1255 = vsel %vm1206, %v1253, 0.0
  %v1256 = vsel %vm1207, %v1252, 0.0
  %v1257 = vsel %vm1208, %v1251, 0.0
  %v1258 = vsel %vm1209, %v1250, 0.0
  %v1259 = vsel %vm1210, %v1249, 0.0
  %v1260 = vsel %vm1211, %v1248, 0.0
  %v1261 = vsel %vm1212, %v1247, 0.0
  %v1262 = vsel %vm1213, %v1246, 0.0
  %v1263 = vsel %vm1214, %v1245, 0.0
  %v1264 = vsel %vm1215, %v1244, 0.0
  %v1265 = vsel %vm1216, %v1243, 0.0
  %v1266 = vsel %vm1217, %v1242, 0.0
  %v1267 = vsel %vm1218, %v1241, 0.0
  %v1268 = vsel %vm1219, %v1240, 0.0
  %v1269 = vsel %vm1220, %v1239, 0.0
  %v1270 = vsel %vm1221, %v1254, 0.0
  %v1271 = vadd.f32 %v1004, %v1190
  %v1272 = vadd.f32 %v1007, %v1191
  %v1273 = vadd.f32 %v1010, %v1192
  %v1274 = vadd.f32 %v1013, %v1193
  %v1275 = vadd.f32 %v1016, %v1194
  %v1276 = vadd.f32 %v1019, %v1195
  %v1277 = vadd.f32 %v1022, %v1196
  %v1278 = vadd.f32 %v1025, %v1197
  %v1279 = vadd.f32 %v1028, %v1198
  %v1280 = vadd.f32 %v1031, %v1199
  %v1281 = vadd.f32 %v1034, %v1200
  %v1282 = vadd.f32 %v1037, %v1201
  %v1283 = vadd.f32 %v1040, %v1202
  %v1284 = vadd.f32 %v1043, %v1203
  %v1285 = vadd.f32 %v1046, %v1204
  %v1286 = vadd.f32 %v1049, %v1205
  %v1287 = vadd.f32 %v1271, %v1255
  %v1288 = vadd.f32 %v1272, %v1256
  %v1289 = vadd.f32 %v1273, %v1257
  %v1290 = vadd.f32 %v1274, %v1258
  %v1291 = vadd.f32 %v1275, %v1259
  %v1292 = vadd.f32 %v1276, %v1260
  %v1293 = vadd.f32 %v1277, %v1261
  %v1294 = vadd.f32 %v1278, %v1262
  %v1295 = vadd.f32 %v1279, %v1263
  %v1296 = vadd.f32 %v1280, %v1264
  %v1297 = vadd.f32 %v1281, %v1265
  %v1298 = vadd.f32 %v1282, %v1266
  %v1299 = vadd.f32 %v1283, %v1267
  %v1300 = vadd.f32 %v1284, %v1268
  %v1301 = vadd.f32 %v1285, %v1269
  %v1302 = vadd.f32 %v1286, %v1270
  %v1303 = vld [vmem:[%s5 + $0x1] sm:$0x1]
  %v1304 = vperm.slane %v1303, 0
  %v1305 = vadd.f32 %v1287, %v1304
  %v1306 = vadd.f32 %v1288, %v1304
  %v1307 = vadd.f32 %v1289, %v1304
  %v1308 = vadd.f32 %v1290, %v1304
  %v1309 = vadd.f32 %v1291, %v1304
  %v1310 = vadd.f32 %v1292, %v1304
  %v1311 = vadd.f32 %v1293, %v1304
  %v1312 = vadd.f32 %v1294, %v1304
  %v1313 = vadd.f32 %v1295, %v1304
  %v1314 = vadd.f32 %v1296, %v1304
  %v1315 = vadd.f32 %v1297, %v1304
  %v1316 = vadd.f32 %v1298, %v1304
  %v1317 = vadd.f32 %v1299, %v1304
  %v1318 = vadd.f32 %v1300, %v1304
  %v1319 = vadd.f32 %v1301, %v1304
  %v1320 = vadd.f32 %v1302, %v1304
  %v1321 = vmax.f32 %v1305, 0.0
  %v1322 = vmax.f32 %v1306, 0.0
  %v1323 = vmax.f32 %v1307, 0.0
  %v1324 = vmax.f32 %v1308, 0.0
  %v1325 = vmax.f32 %v1309, 0.0
  %v1326 = vmax.f32 %v1310, 0.0
  %v1327 = vmax.f32 %v1311, 0.0
  %v1328 = vmax.f32 %v1312, 0.0
  %v1329 = vmax.f32 %v1313, 0.0
  %v1330 = vmax.f32 %v1314, 0.0
  %v1331 = vmax.f32 %v1315, 0.0
  %v1332 = vmax.f32 %v1316, 0.0
  %v1333 = vmax.f32 %v1317, 0.0
  %v1334 = vmax.f32 %v1318, 0.0
  %v1335 = vmax.f32 %v1319, 0.0
  %v1336 = vmax.f32 %v1320, 0.0
  %v1337 = vrot.slane %v1321, 1
  %v1338 = vrot.slane %v1322, 1
  %v1339 = vrot.slane %v1323, 1
  %v1340 = vrot.slane %v1324, 1
  %v1341 = vrot.slane %v1325, 1
  %v1342 = vrot.slane %v1326, 1
  %v1343 = vrot.slane %v1327, 1
  %v1344 = vrot.slane %v1328, 1
  %v1345 = vrot.slane %v1329, 1
  %v1346 = vrot.slane %v1330, 1
  %v1347 = vrot.slane %v1331, 1
  %v1348 = vrot.slane %v1332, 1
  %v1349 = vrot.slane %v1333, 1
  %v1350 = vrot.slane %v1334, 1
  %v1351 = vrot.slane %v1335, 1
  %v1352 = vrot.slane %v1336, 1
  %v1353 = vsel %vm1238, %v1351, %v1352
  %v1354 = vsel %vm1238, %v1350, %v1351
  %v1355 = vsel %vm1238, %v1349, %v1350
  %v1356 = vsel %vm1238, %v1348, %v1349
  %v1357 = vsel %vm1238, %v1347, %v1348
  %v1358 = vsel %vm1238, %v1346, %v1347
  %v1359 = vsel %vm1238, %v1345, %v1346
  %v1360 = vsel %vm1238, %v1344, %v1345
  %v1361 = vsel %vm1238, %v1343, %v1344
  %v1362 = vsel %vm1238, %v1342, %v1343
  %v1363 = vsel %vm1238, %v1341, %v1342
  %v1364 = vsel %vm1238, %v1340, %v1341
  %v1365 = vsel %vm1238, %v1339, %v1340
  %v1366 = vsel %vm1238, %v1338, %v1339
  %v1367 = vsel %vm1238, %v1337, %v1338
  %v1368 = vsel %vm1238, %v1352, %v1337
  %v1369 = vmax.f32 %v1321, %v1367
  %v1370 = vmax.f32 %v1322, %v1366
  %v1371 = vmax.f32 %v1323, %v1365
  %v1372 = vmax.f32 %v1324, %v1364
  %v1373 = vmax.f32 %v1325, %v1363
  %v1374 = vmax.f32 %v1326, %v1362
  %v1375 = vmax.f32 %v1327, %v1361
  %v1376 = vmax.f32 %v1328, %v1360
  %v1377 = vmax.f32 %v1329, %v1359
  %v1378 = vmax.f32 %v1330, %v1358
  %v1379 = vmax.f32 %v1331, %v1357
  %v1380 = vmax.f32 %v1332, %v1356
  %v1381 = vmax.f32 %v1333, %v1355
  %v1382 = vmax.f32 %v1334, %v1354
  %v1383 = vmax.f32 %v1335, %v1353
  %v1384 = vmax.f32 %v1336, %v1368
  %v1385 = vlaneseq
  %v1386 = vand.u32 %v1385, 127
  %v1387 = vand.u32 %v1109, 15
  %v1388 = vand.u32 %v1110, 15
  %v1389 = vand.u32 %v1111, 15
  %v1390 = vand.u32 %v1112, 15
  %v1391 = vand.u32 %v1113, 15
  %v1392 = vand.u32 %v1114, 15
  %v1393 = vand.u32 %v1115, 15
  %v1394 = vand.u32 %v1116, 15
  %v1395 = vshra.s32 %v1109, 4
  %v1396 = vshra.s32 %v1110, 4
  %v1397 = vshra.s32 %v1111, 4
  %v1398 = vshra.s32 %v1112, 4
  %v1399 = vshra.s32 %v1113, 4
  %v1400 = vshra.s32 %v1114, 4
  %v1401 = vshra.s32 %v1115, 4
  %v1402 = vshra.s32 %v1116, 4
  %v1403 = vmul.u32 %v1387, 8
  %v1404 = vmul.u32 %v1388, 8
  %v1405 = vmul.u32 %v1389, 8
  %v1406 = vmul.u32 %v1390, 8
  %v1407 = vmul.u32 %v1391, 8
  %v1408 = vmul.u32 %v1392, 8
  %v1409 = vmul.u32 %v1393, 8
  %v1410 = vmul.u32 %v1394, 8
  %v1411 = vmul.u32 %v1395, 2
  %v1412 = vmul.u32 %v1396, 2
  %v1413 = vmul.u32 %v1397, 2
  %v1414 = vmul.u32 %v1398, 2
  %v1415 = vmul.u32 %v1399, 2
  %v1416 = vmul.u32 %v1400, 2
  %v1417 = vmul.u32 %v1401, 2
  %v1418 = vmul.u32 %v1402, 2
  %v1419 = vadd.s32 %v1403, %v1411
  %v1420 = vadd.s32 %v1404, %v1412
  %v1421 = vadd.s32 %v1405, %v1413
  %v1422 = vadd.s32 %v1406, %v1414
  %v1423 = vadd.s32 %v1407, %v1415
  %v1424 = vadd.s32 %v1408, %v1416
  %v1425 = vadd.s32 %v1409, %v1417
  %v1426 = vadd.s32 %v1410, %v1418
  %vm1427 = vcmp.eq.s32.totalorder %v1386, %v1419
  %vm1428 = vcmp.eq.s32.totalorder %v1386, %v1420
  %vm1429 = vcmp.eq.s32.totalorder %v1386, %v1421
  %vm1430 = vcmp.eq.s32.totalorder %v1386, %v1422
  %vm1431 = vcmp.eq.s32.totalorder %v1386, %v1423
  %vm1432 = vcmp.eq.s32.totalorder %v1386, %v1424
  %vm1433 = vcmp.eq.s32.totalorder %v1386, %v1425
  %vm1434 = vcmp.eq.s32.totalorder %v1386, %v1426
  %v1435 = vsel %vm1427, 1, 0
  %v1436 = vsel %vm1428, 1, 0
  %v1437 = vsel %vm1429, 1, 0
  %v1438 = vsel %vm1430, 1, 0
  %v1439 = vsel %vm1431, 1, 0
  %v1440 = vsel %vm1432, 1, 0
  %v1441 = vsel %vm1433, 1, 0
  %v1442 = vsel %vm1434, 1, 0
  %v1443 = vcvt.s32.f32 %v1435
  %v1444 = vcvt.s32.f32 %v1436
  %v1445 = vcvt.s32.f32 %v1437
  %v1446 = vcvt.s32.f32 %v1438
  %v1447 = vcvt.s32.f32 %v1439
  %v1448 = vcvt.s32.f32 %v1440
  %v1449 = vcvt.s32.f32 %v1441
  %v1450 = vcvt.s32.f32 %v1442
  %1451 = vmatpush.msra.mxu0 %v1384
  %1452 = vmatpush.msra.mxu0 %v1383
  %1453 = vmatpush.msra.mxu0 %v1382
  %1454 = vmatpush.msra.mxu0 %v1381
  %1455 = vmatpush.msra.mxu0 %v1380
  %1456 = vmatpush.msra.mxu0 %v1379
  %1457 = vmatpush.msra.mxu0 %v1378
  %1458 = vmatpush.msra.mxu0 %v1377
  %1459 = vmatpush.msra.mxu0 %v1376
  %1460 = vmatpush.msra.mxu0 %v1375
  %1461 = vmatpush.msra.mxu0 %v1374
  %1462 = vmatpush.msra.mxu0 %v1373
  %1463 = vmatpush.msra.mxu0 %v1372
  %1464 = vmatpush.msra.mxu0 %v1371
  %1465 = vmatpush.msra.mxu0 %v1370
  %1466 = vmatpush.msra.mxu0 %v1369
  %1467 = vmatmul.f32.gmra.mxu0 %v1443
  %v1468 = vpop.f32.mrf.mxu0
  %v1469 = vadd.f32 0.0, %v1468
  %1470 = vmatmul.f32.gmra.mxu0 %v1444
  %v1471 = vpop.f32.mrf.mxu0
  %v1472 = vadd.f32 0.0, %v1471
  %1473 = vmatmul.f32.gmra.mxu0 %v1445
  %v1474 = vpop.f32.mrf.mxu0
  %v1475 = vadd.f32 0.0, %v1474
  %1476 = vmatmul.f32.gmra.mxu0 %v1446
  %v1477 = vpop.f32.mrf.mxu0
  %v1478 = vadd.f32 0.0, %v1477
  %1479 = vmatmul.f32.gmra.mxu0 %v1447
  %v1480 = vpop.f32.mrf.mxu0
  %v1481 = vadd.f32 0.0, %v1480
  %1482 = vmatmul.f32.gmra.mxu0 %v1448
  %v1483 = vpop.f32.mrf.mxu0
  %v1484 = vadd.f32 0.0, %v1483
  %1485 = vmatmul.f32.gmra.mxu0 %v1449
  %v1486 = vpop.f32.mrf.mxu0
  %v1487 = vadd.f32 0.0, %v1486
  %1488 = vmatmul.f32.gmra.mxu0 %v1450
  %v1489 = vpop.f32.mrf.mxu0
  %v1490 = vadd.f32 0.0, %v1489
  %1491 = vdwg.mxu0
  %v1492 = vld [vmem:[%s3] sm:$0xf]
  %v1493 = vld [vmem:[%s3 + $0x4] sm:$0xf]
  %v1494 = vld [vmem:[%s3 + $0x8] sm:$0xf]
  %v1495 = vld [vmem:[%s3 + $0xc] sm:$0xf]
  %v1496 = vld [vmem:[%s3 + $0x10] sm:$0xf]
  %v1497 = vld [vmem:[%s3 + $0x14] sm:$0xf]
  %v1498 = vld [vmem:[%s3 + $0x18] sm:$0xf]
  %v1499 = vld [vmem:[%s3 + $0x1c] sm:$0xf]
  %v1500 = vld [vmem:[%s3 + $0x20] sm:$0xf]
  %v1501 = vld [vmem:[%s3 + $0x24] sm:$0xf]
  %v1502 = vld [vmem:[%s3 + $0x28] sm:$0xf]
  %v1503 = vld [vmem:[%s3 + $0x2c] sm:$0xf]
  %v1504 = vld [vmem:[%s3 + $0x30] sm:$0xf]
  %v1505 = vld [vmem:[%s3 + $0x34] sm:$0xf]
  %v1506 = vld [vmem:[%s3 + $0x38] sm:$0xf]
  %v1507 = vld [vmem:[%s3 + $0x3c] sm:$0xf]
  %v1508 = vld [vmem:[%s3 + $0x40] sm:$0xf]
  %v1509 = vld [vmem:[%s3 + $0x44] sm:$0xf]
  %v1510 = vld [vmem:[%s3 + $0x48] sm:$0xf]
  %v1511 = vld [vmem:[%s3 + $0x4c] sm:$0xf]
  %v1512 = vld [vmem:[%s3 + $0x50] sm:$0xf]
  %v1513 = vld [vmem:[%s3 + $0x54] sm:$0xf]
  %v1514 = vld [vmem:[%s3 + $0x58] sm:$0xf]
  %v1515 = vld [vmem:[%s3 + $0x5c] sm:$0xf]
  %v1516 = vld [vmem:[%s3 + $0x60] sm:$0xf]
  %v1517 = vld [vmem:[%s3 + $0x64] sm:$0xf]
  %v1518 = vld [vmem:[%s3 + $0x68] sm:$0xf]
  %v1519 = vld [vmem:[%s3 + $0x6c] sm:$0xf]
  %v1520 = vld [vmem:[%s3 + $0x70] sm:$0xf]
  %v1521 = vld [vmem:[%s3 + $0x74] sm:$0xf]
  %v1522 = vld [vmem:[%s3 + $0x78] sm:$0xf]
  %v1523 = vld [vmem:[%s3 + $0x7c] sm:$0xf]
  %v1524 = vld [vmem:[%s3 + $0x80] sm:$0xf]
  %v1525 = vld [vmem:[%s3 + $0x84] sm:$0xf]
  %v1526 = vld [vmem:[%s3 + $0x88] sm:$0xf]
  %v1527 = vld [vmem:[%s3 + $0x8c] sm:$0xf]
  %v1528 = vld [vmem:[%s3 + $0x90] sm:$0xf]
  %v1529 = vld [vmem:[%s3 + $0x94] sm:$0xf]
  %v1530 = vld [vmem:[%s3 + $0x98] sm:$0xf]
  %v1531 = vld [vmem:[%s3 + $0x9c] sm:$0xf]
  %v1532 = vld [vmem:[%s3 + $0xa0] sm:$0xf]
  %v1533 = vld [vmem:[%s3 + $0xa4] sm:$0xf]
  %v1534 = vld [vmem:[%s3 + $0xa8] sm:$0xf]
  %v1535 = vld [vmem:[%s3 + $0xac] sm:$0xf]
  %v1536 = vld [vmem:[%s3 + $0xb0] sm:$0xf]
  %v1537 = vld [vmem:[%s3 + $0xb4] sm:$0xf]
  %v1538 = vld [vmem:[%s3 + $0xb8] sm:$0xf]
  %v1539 = vld [vmem:[%s3 + $0xbc] sm:$0xf]
  %v1540 = vld [vmem:[%s3 + $0xc0] sm:$0xf]
  %v1541 = vld [vmem:[%s3 + $0xc4] sm:$0xf]
  %v1542 = vld [vmem:[%s3 + $0xc8] sm:$0xf]
  %v1543 = vld [vmem:[%s3 + $0xcc] sm:$0xf]
  %v1544 = vld [vmem:[%s3 + $0xd0] sm:$0xf]
  %v1545 = vld [vmem:[%s3 + $0xd4] sm:$0xf]
  %v1546 = vld [vmem:[%s3 + $0xd8] sm:$0xf]
  %v1547 = vld [vmem:[%s3 + $0xdc] sm:$0xf]
  %v1548 = vld [vmem:[%s3 + $0xe0] sm:$0xf]
  %v1549 = vld [vmem:[%s3 + $0xe4] sm:$0xf]
  %v1550 = vld [vmem:[%s3 + $0xe8] sm:$0xf]
  %v1551 = vld [vmem:[%s3 + $0xec] sm:$0xf]
  %v1552 = vld [vmem:[%s3 + $0xf0] sm:$0xf]
  %v1553 = vld [vmem:[%s3 + $0xf4] sm:$0xf]
  %v1554 = vld [vmem:[%s3 + $0xf8] sm:$0xf]
  %v1555 = vld [vmem:[%s3 + $0xfc] sm:$0xf]
  %v1556 = vld [vmem:[%s5 + $0x2] sm:$0x1]
  %v1557 = vperm.slane %v1556, 0
  %v1622 = vunpack.c.l.b16 %v1492
  %v1623 = vunpack.c.l.b16 %v1493
  %v1624 = vunpack.c.l.b16 %v1494
  %v1625 = vunpack.c.l.b16 %v1495
  %v1626 = vunpack.c.l.b16 %v1496
  %v1627 = vunpack.c.l.b16 %v1497
  %v1628 = vunpack.c.l.b16 %v1498
  %v1629 = vunpack.c.l.b16 %v1499
  %v1630 = vunpack.c.l.b16 %v1500
  %v1631 = vunpack.c.l.b16 %v1501
  %v1632 = vunpack.c.l.b16 %v1502
  %v1633 = vunpack.c.l.b16 %v1503
  %v1634 = vunpack.c.l.b16 %v1504
  %v1635 = vunpack.c.l.b16 %v1505
  %v1636 = vunpack.c.l.b16 %v1506
  %v1637 = vunpack.c.l.b16 %v1507
  %v1638 = vunpack.c.l.b16 %v1508
  %v1639 = vunpack.c.l.b16 %v1509
  %v1640 = vunpack.c.l.b16 %v1510
  %v1641 = vunpack.c.l.b16 %v1511
  %v1642 = vunpack.c.l.b16 %v1512
  %v1643 = vunpack.c.l.b16 %v1513
  %v1644 = vunpack.c.l.b16 %v1514
  %v1645 = vunpack.c.l.b16 %v1515
  %v1646 = vunpack.c.l.b16 %v1516
  %v1647 = vunpack.c.l.b16 %v1517
  %v1648 = vunpack.c.l.b16 %v1518
  %v1649 = vunpack.c.l.b16 %v1519
  %v1650 = vunpack.c.l.b16 %v1520
  %v1651 = vunpack.c.l.b16 %v1521
  %v1652 = vunpack.c.l.b16 %v1522
  %v1653 = vunpack.c.l.b16 %v1523
  %v1654 = vunpack.c.l.b16 %v1524
  %v1655 = vunpack.c.l.b16 %v1525
  %v1656 = vunpack.c.l.b16 %v1526
  %v1657 = vunpack.c.l.b16 %v1527
  %v1658 = vunpack.c.l.b16 %v1528
  %v1659 = vunpack.c.l.b16 %v1529
  %v1660 = vunpack.c.l.b16 %v1530
  %v1661 = vunpack.c.l.b16 %v1531
  %v1662 = vunpack.c.l.b16 %v1532
  %v1663 = vunpack.c.l.b16 %v1533
  %v1664 = vunpack.c.l.b16 %v1534
  %v1665 = vunpack.c.l.b16 %v1535
  %v1666 = vunpack.c.l.b16 %v1536
  %v1667 = vunpack.c.l.b16 %v1537
  %v1668 = vunpack.c.l.b16 %v1538
  %v1669 = vunpack.c.l.b16 %v1539
  %v1670 = vunpack.c.l.b16 %v1540
  %v1671 = vunpack.c.l.b16 %v1541
  %v1672 = vunpack.c.l.b16 %v1542
  %v1673 = vunpack.c.l.b16 %v1543
  %v1674 = vunpack.c.l.b16 %v1544
  %v1675 = vunpack.c.l.b16 %v1545
  %v1676 = vunpack.c.l.b16 %v1546
  %v1677 = vunpack.c.l.b16 %v1547
  %v1678 = vunpack.c.l.b16 %v1548
  %v1679 = vunpack.c.l.b16 %v1549
  %v1680 = vunpack.c.l.b16 %v1550
  %v1681 = vunpack.c.l.b16 %v1551
  %v1682 = vunpack.c.l.b16 %v1552
  %v1683 = vunpack.c.l.b16 %v1553
  %v1684 = vunpack.c.l.b16 %v1554
  %v1685 = vunpack.c.l.b16 %v1555
  %v1686 = vpack.c.b16 %v1623, %v1622
  %v1687 = vpack.c.b16 %v1625, %v1624
  %v1688 = vpack.c.b16 %v1627, %v1626
  %v1689 = vpack.c.b16 %v1629, %v1628
  %v1690 = vpack.c.b16 %v1631, %v1630
  %v1691 = vpack.c.b16 %v1633, %v1632
  %v1692 = vpack.c.b16 %v1635, %v1634
  %v1693 = vpack.c.b16 %v1637, %v1636
  %v1694 = vpack.c.b16 %v1639, %v1638
  %v1695 = vpack.c.b16 %v1641, %v1640
  %v1696 = vpack.c.b16 %v1643, %v1642
  %v1697 = vpack.c.b16 %v1645, %v1644
  %v1698 = vpack.c.b16 %v1647, %v1646
  %v1699 = vpack.c.b16 %v1649, %v1648
  %v1700 = vpack.c.b16 %v1651, %v1650
  %v1701 = vpack.c.b16 %v1653, %v1652
  %v1702 = vpack.c.b16 %v1655, %v1654
  %v1703 = vpack.c.b16 %v1657, %v1656
  %v1704 = vpack.c.b16 %v1659, %v1658
  %v1705 = vpack.c.b16 %v1661, %v1660
  %v1706 = vpack.c.b16 %v1663, %v1662
  %v1707 = vpack.c.b16 %v1665, %v1664
  %v1708 = vpack.c.b16 %v1667, %v1666
  %v1709 = vpack.c.b16 %v1669, %v1668
  %v1710 = vpack.c.b16 %v1671, %v1670
  %v1711 = vpack.c.b16 %v1673, %v1672
  %v1712 = vpack.c.b16 %v1675, %v1674
  %v1713 = vpack.c.b16 %v1677, %v1676
  %v1714 = vpack.c.b16 %v1679, %v1678
  %v1715 = vpack.c.b16 %v1681, %v1680
  %v1716 = vpack.c.b16 %v1683, %v1682
  %v1717 = vpack.c.b16 %v1685, %v1684
  %1750 = vmatpush.bf16.msra.mxu0 %v1693
  %1751 = vmatpush.bf16.msra.mxu0 %v1692
  %1752 = vmatpush.bf16.msra.mxu0 %v1691
  %1753 = vmatpush.bf16.msra.mxu0 %v1690
  %1754 = vmatpush.bf16.msra.mxu0 %v1689
  %1755 = vmatpush.bf16.msra.mxu0 %v1688
  %1756 = vmatpush.bf16.msra.mxu0 %v1687
  %1757 = vmatpush.bf16.msra.mxu0 %v1686
  %1758 = vmatmul.f32.gmra.mxu0 %v1469
  %v1759 = vpop.f32.mrf.mxu0
  %v1760 = vadd.f32 %v1557, %v1759
  %1761 = vmatmul.f32.gmra.mxu0 %v1472
  %v1762 = vpop.f32.mrf.mxu0
  %v1763 = vadd.f32 %v1557, %v1762
  %1764 = vdwg.mxu0
  %1765 = vmatpush.bf16.msra.mxu0 %v1701
  %1766 = vmatpush.bf16.msra.mxu0 %v1700
  %1767 = vmatpush.bf16.msra.mxu0 %v1699
  %1768 = vmatpush.bf16.msra.mxu0 %v1698
  %1769 = vmatpush.bf16.msra.mxu0 %v1697
  %1770 = vmatpush.bf16.msra.mxu0 %v1696
  %1771 = vmatpush.bf16.msra.mxu0 %v1695
  %1772 = vmatpush.bf16.msra.mxu0 %v1694
  %1773 = vmatmul.f32.gmra.mxu0 %v1475
  %v1774 = vpop.f32.mrf.mxu0
  %v1775 = vadd.f32 %v1760, %v1774
  %1776 = vmatmul.f32.gmra.mxu0 %v1478
  %v1777 = vpop.f32.mrf.mxu0
  %v1778 = vadd.f32 %v1763, %v1777
  %1779 = vdwg.mxu0
  %1780 = vmatpush.bf16.msra.mxu0 %v1709
  %1781 = vmatpush.bf16.msra.mxu0 %v1708
  %1782 = vmatpush.bf16.msra.mxu0 %v1707
  %1783 = vmatpush.bf16.msra.mxu0 %v1706
  %1784 = vmatpush.bf16.msra.mxu0 %v1705
  %1785 = vmatpush.bf16.msra.mxu0 %v1704
  %1786 = vmatpush.bf16.msra.mxu0 %v1703
  %1787 = vmatpush.bf16.msra.mxu0 %v1702
  %1788 = vmatmul.f32.gmra.mxu0 %v1481
  %v1789 = vpop.f32.mrf.mxu0
  %v1790 = vadd.f32 %v1775, %v1789
  %1791 = vmatmul.f32.gmra.mxu0 %v1484
  %v1792 = vpop.f32.mrf.mxu0
  %v1793 = vadd.f32 %v1778, %v1792
  %1794 = vdwg.mxu0
  %1795 = vmatpush.bf16.msra.mxu0 %v1717
  %1796 = vmatpush.bf16.msra.mxu0 %v1716
  %1797 = vmatpush.bf16.msra.mxu0 %v1715
  %1798 = vmatpush.bf16.msra.mxu0 %v1714
  %1799 = vmatpush.bf16.msra.mxu0 %v1713
  %1800 = vmatpush.bf16.msra.mxu0 %v1712
  %1801 = vmatpush.bf16.msra.mxu0 %v1711
  %1802 = vmatpush.bf16.msra.mxu0 %v1710
  %1803 = vmatmul.f32.gmra.mxu0 %v1487
  %v1804 = vpop.f32.mrf.mxu0
  %v1805 = vadd.f32 %v1790, %v1804
  %1806 = vmatmul.f32.gmra.mxu0 %v1490
  %v1807 = vpop.f32.mrf.mxu0
  %v1808 = vadd.f32 %v1793, %v1807
  %1809 = vdwg.mxu0
  %v1810 = vmax.f32 %v1805, 0.0
  %v1811 = vmax.f32 %v1808, 0.0
  %v1812 = vld [vmem:[%s4] sm:$0xf]
  %v1813 = vld [vmem:[%s4 + $0x4] sm:$0xf]
  %v1814 = vld [vmem:[%s4 + $0x8] sm:$0xf]
  %v1815 = vld [vmem:[%s4 + $0xc] sm:$0xf]
  %v1816 = vld [vmem:[%s5 + $0x3] sm:$0x1]
  %v1817 = vperm.slane %v1816, 0
  %v1822 = vunpack.c.l.b16 %v1812
  %v1823 = vunpack.c.l.b16 %v1813
  %v1824 = vunpack.c.l.b16 %v1814
  %v1825 = vunpack.c.l.b16 %v1815
  %v1826 = vpack.c.b16 %v1823, %v1822
  %v1827 = vpack.c.b16 %v1825, %v1824
  %v1831 = vsel %vm888, %v1810, 0
  %v1834 = vsel %vm888, %v1811, 0
  %1836 = vmatpush.bf16.msra.mxu0 0
  %1837 = vmatpush.bf16.msra.mxu0 0
  %1838 = vmatpush.bf16.msra.mxu0 0
  %1839 = vmatpush.bf16.msra.mxu0 0
  %1840 = vmatpush.bf16.msra.mxu0 0
  %1841 = vmatpush.bf16.msra.mxu0 0
  %1842 = vmatpush.bf16.msra.mxu0 %v1827
  %1843 = vmatpush.bf16.msra.mxu0 %v1826
  %1844 = vmatmul.f32.gmra.mxu0 %v1831
  %v1845 = vpop.f32.mrf.mxu0
  %v1846 = vadd.f32 %v1817, %v1845
  %1847 = vmatmul.f32.gmra.mxu0 %v1834
  %v1848 = vpop.f32.mrf.mxu0
  %v1849 = vadd.f32 %v1817, %v1848
  %1850 = vdwg.mxu0
  %1851 = vst [vmem:[%s6] sm:$0xff] %v1846
  %1852 = vst [vmem:[%s6 + $0x8] sm:$0xff] %v1849
  // Predicated region
  $region26: #{forward.1} parent=0 // pred_check
    _
  $region27: #{forward.1} parent=0 // pred_check_branch
    %1854 = sbr.rel (0) target = $region29
  $region28: #{forward.1} parent=0 // pred_region
    _
  $region29: #{forward.1} parent=0 // pred_fallthru
    _
  // Predicated region
  $region30: #{forward.1} parent=0 // pred_check
    _
  $region31: #{forward.1} parent=0 // pred_check_branch
    %1856 = sbr.rel (0) target = $region33
  $region32: #{forward.1} parent=0 // pred_region
    _
  $region33: #{forward.1} parent=0 // pred_fallthru
    _

</llo_original>
